<compile_context>
chip_gen: v7x
topology: tpu7x:2x2x1
jax: 0.10.0
libtpu: 0.0.40
codegen_flags: <defaults>
</compile_context>

<pallas_src>
import functools

import jax
import jax.numpy as jnp
from jax.experimental import pallas as pl
from jax.experimental.pallas import tpu as pltpu


# ------------------------------ small helpers ---------------------------------
def _fold_bn(bn, eps=1e-5):
    """Fold eval-mode BatchNorm into per-channel scale/shift (f32)."""
    gamma, beta, mean, var = bn
    scale = (gamma / jnp.sqrt(var + eps)).astype(jnp.float32)
    shift = (beta - mean * scale).astype(jnp.float32)
    return scale, shift


def _im2col_3x3(pad_ref, Ho, Wo):
    """Build the (Ho*Wo, 9*C) im2col operand from a zero-padded VMEM ref."""
    M = Ho * Wo
    C = pad_ref.shape[-1]
    cols = [pad_ref[kh:kh + Ho, kw:kw + Wo, :].reshape(M, C)
            for kh in range(3) for kw in range(3)]
    return jnp.concatenate(cols, axis=-1)


def _bn2_conv2_residual(y1, s2, b2, w2_ref, res, pad2_ref, o_ref, Ho, Wo, Cout):
    """Shared tail: BN2+ReLU -> conv2 (3x3, stride 1) -> + residual -> store."""
    M = Ho * Wo
    h2 = jnp.maximum(y1 * s2 + b2, 0.0)                      # BN2(eval)+ReLU, f32
    # TODO(synk): nn.Dropout(drop_rate) treated as identity here (eval mode).
    pad2_ref[...] = jnp.zeros(pad2_ref.shape, pad2_ref.dtype)
    pad2_ref[1:Ho + 1, 1:Wo + 1, :] = h2.reshape(Ho, Wo, Cout).astype(pad2_ref.dtype)
    im2 = _im2col_3x3(pad2_ref, Ho, Wo)                      # (M, 9*Cout)
    y2 = jnp.dot(im2.astype(w2_ref.dtype), w2_ref[...],
                 preferred_element_type=jnp.float32)         # (M, Cout)
    o_ref[0] = (y2 + res).reshape(Ho, Wo, Cout).astype(o_ref.dtype)


# ----------------------- fused basic block, stride == 1 -----------------------
def _wrn_block_stride1_kernel(*refs, H, W, Cin, Cout, proj):
    if proj:
        (x_ref, s1_ref, b1_ref, w1_ref, s2_ref, b2_ref, w2_ref, wsc_ref,
         o_ref, pad1_ref, pad2_ref) = refs
    else:
        (x_ref, s1_ref, b1_ref, w1_ref, s2_ref, b2_ref, w2_ref,
         o_ref, pad1_ref, pad2_ref) = refs
        wsc_ref = None

    M = H * W
    x = x_ref[0]                                             # (H, W, Cin) f32
    h = jnp.maximum(x * s1_ref[...] + b1_ref[...], 0.0)      # BN1(eval)+ReLU

    # Zero-padded conv1 input lives in VMEM scratch (no HBM round trip).
    pad1_ref[...] = jnp.zeros(pad1_ref.shape, pad1_ref.dtype)
    pad1_ref[1:H + 1, 1:W + 1, :] = h.astype(pad1_ref.dtype)

    im1 = _im2col_3x3(pad1_ref, H, W)                        # (M, 9*Cin)
    y1 = jnp.dot(im1.astype(w1_ref.dtype), w1_ref[...],
                 preferred_element_type=jnp.float32)         # (M, Cout)

    if proj:
        # Projection shortcut sees the RAW input (per the PyTorch module).
        res = jnp.dot(x.reshape(M, Cin).astype(wsc_ref.dtype), wsc_ref[...],
                      preferred_element_type=jnp.float32)
    else:
        # Identity shortcut adds relu(bn1(x)) (the "preprocessing" output).
        res = h.reshape(M, Cout)

    _bn2_conv2_residual(y1, s2_ref[...], b2_ref[...], w2_ref, res,
                        pad2_ref, o_ref, H, W, Cout)


def _basic_block_stride1(x, p, matmul_dtype):
    N, H, W, Cin = x.shape
    Cout = p["w1"].shape[-1]
    proj = "w_sc" in p
    dt = matmul_dtype

    s1, b1 = _fold_bn(p["bn1"])
    s2, b2 = _fold_bn(p["bn2"])
    w1f = p["w1"].reshape(9 * Cin, Cout).astype(dt)          # tap-major im2col layout
    w2f = p["w2"].reshape(9 * Cout, Cout).astype(dt)

    ins = [x, s1.reshape(1, Cin), b1.reshape(1, Cin), w1f,
           s2.reshape(1, Cout), b2.reshape(1, Cout), w2f]
    in_specs = [
        pl.BlockSpec((1, H, W, Cin), lambda n: (n, 0, 0, 0)),
        pl.BlockSpec((1, Cin), lambda n: (0, 0)),
        pl.BlockSpec((1, Cin), lambda n: (0, 0)),
        pl.BlockSpec((9 * Cin, Cout), lambda n: (0, 0)),
        pl.BlockSpec((1, Cout), lambda n: (0, 0)),
        pl.BlockSpec((1, Cout), lambda n: (0, 0)),
        pl.BlockSpec((9 * Cout, Cout), lambda n: (0, 0)),
    ]
    if proj:
        ins.append(p["w_sc"].astype(dt))
        in_specs.append(pl.BlockSpec((Cin, Cout), lambda n: (0, 0)))

    kernel = functools.partial(_wrn_block_stride1_kernel,
                               H=H, W=W, Cin=Cin, Cout=Cout, proj=proj)
    return pl.pallas_call(
        kernel,
        out_shape=jax.ShapeDtypeStruct((N, H, W, Cout), x.dtype),
        grid=(N,),
        in_specs=in_specs,
        out_specs=pl.BlockSpec((1, H, W, Cout), lambda n: (n, 0, 0, 0)),
        scratch_shapes=[pltpu.VMEM((H + 2, W + 2, Cin), jnp.float32),
                        pltpu.VMEM((H + 2, W + 2, Cout), jnp.float32)],
        compiler_params=pltpu.CompilerParams(dimension_semantics=("parallel",)),
    )(*ins)


# ----------------- fused basic block, stride == 2 (space-to-depth) -------------
def _wrn_block_s2d_kernel(hs_ref, xsc_ref, w1_ref, s2_ref, b2_ref, w2_ref, wsc_ref,
                          o_ref, pad2_ref, *, Ho, Wo, Cin, Cout):
    M = Ho * Wo
    # hs: relu(bn1(x)) zero-padded + space-to-depth -> (Ho+1, Wo+1, 4*Cin).
    hs = hs_ref[0]
    cols = [hs[ah:ah + Ho, aw:aw + Wo, :].reshape(M, 4 * Cin)
            for ah in range(2) for aw in range(2)]
    im1 = jnp.concatenate(cols, axis=-1)                     # (M, 16*Cin)
    y1 = jnp.dot(im1.astype(w1_ref.dtype), w1_ref[...],
                 preferred_element_type=jnp.float32)         # conv1 (3x3, stride 2)

    # 1x1 / stride-2 projection shortcut on the RAW (subsampled) input.
    res = jnp.dot(xsc_ref[0].reshape(M, Cin).astype(wsc_ref.dtype), wsc_ref[...],
                  preferred_element_type=jnp.float32)

    _bn2_conv2_residual(y1, s2_ref[...], b2_ref[...], w2_ref, res,
                        pad2_ref, o_ref, Ho, Wo, Cout)


def _basic_block_stride2(x, p, matmul_dtype):
    N, H, W, Cin = x.shape
    Cout = p["w1"].shape[-1]
    assert H % 2 == 0 and W % 2 == 0, "stride-2 block expects even H, W"
    Ho, Wo = H // 2, W // 2
    Hs, Ws = Ho + 1, Wo + 1
    dt = matmul_dtype

    s1, b1 = _fold_bn(p["bn1"])
    s2, b2 = _fold_bn(p["bn2"])

    # BN1+ReLU, zero-pad (padding=1) and space-to-depth.  These are elementwise /
    # layout ops that XLA fuses into one pass over the smallest activation; the
    # rearrangement makes every in-kernel access unit-stride (no strided slices).
    h = jnp.maximum(x * s1.reshape(1, 1, 1, Cin) + b1.reshape(1, 1, 1, Cin), 0.0)
    hp = jnp.pad(h, ((0, 0), (1, 1), (1, 1), (0, 0)))
    hs = (hp.reshape(N, Hs, 2, Ws, 2, Cin)
            .transpose(0, 1, 3, 2, 4, 5)
            .reshape(N, Hs, Ws, 4 * Cin))
    x_sc = x[:, ::2, ::2, :]                                 # raw input, subsampled

    # Stride-2 3x3 conv == stride-1 2x2 conv on the space-to-depth input.
    w_s2d = jnp.zeros((2, 2, 2, 2, Cin, Cout), p["w1"].dtype)
    for ah in range(2):
        for aw in range(2):
            for ph in range(2):
                for pw in range(2):
                    kh, kw = 2 * ah + ph, 2 * aw + pw
                    if kh < 3 and kw < 3:
                        w_s2d = w_s2d.at[ah, aw, ph, pw].set(p["w1"][kh, kw])
    w1f = w_s2d.reshape(16 * Cin, Cout).astype(dt)
    w2f = p["w2"].reshape(9 * Cout, Cout).astype(dt)
    wsc = p["w_sc"].astype(dt)

    kernel = functools.partial(_wrn_block_s2d_kernel,
                               Ho=Ho, Wo=Wo, Cin=Cin, Cout=Cout)
    return pl.pallas_call(
        kernel,
        out_shape=jax.ShapeDtypeStruct((N, Ho, Wo, Cout), x.dtype),
        grid=(N,),
        in_specs=[
            pl.BlockSpec((1, Hs, Ws, 4 * Cin), lambda n: (n, 0, 0, 0)),
            pl.BlockSpec((1, Ho, Wo, Cin), lambda n: (n, 0, 0, 0)),
            pl.BlockSpec((16 * Cin, Cout), lambda n: (0, 0)),
            pl.BlockSpec((1, Cout), lambda n: (0, 0)),
            pl.BlockSpec((1, Cout), lambda n: (0, 0)),
            pl.BlockSpec((9 * Cout, Cout), lambda n: (0, 0)),
            pl.BlockSpec((Cin, Cout), lambda n: (0, 0)),
        ],
        out_specs=pl.BlockSpec((1, Ho, Wo, Cout), lambda n: (n, 0, 0, 0)),
        scratch_shapes=[pltpu.VMEM((Ho + 2, Wo + 2, Cout), jnp.float32)],
        compiler_params=pltpu.CompilerParams(dimension_semantics=("parallel",)),
    )(hs, x_sc, w1f, s2.reshape(1, Cout), b2.reshape(1, Cout), w2f, wsc)


# ------------------------------- public forward --------------------------------
def wrn_basic_block(x, p, matmul_dtype=jnp.bfloat16):
    """One WRNBasicBlock forward in NHWC (fully fused in a single pallas_call)."""
    stride = p["stride"]
    assert stride in (1, 2), "WRN uses stride 1 or 2"
    if stride == 1:
        return _basic_block_stride1(x, p, matmul_dtype)
    return _basic_block_stride2(x, p, matmul_dtype)


def wrn_block_forward(x_nchw, params, matmul_dtype=jnp.bfloat16):
    """WRNBlock forward. Input/output are NCHW to match the PyTorch module.

    `matmul_dtype=jnp.float32` gives exact f32 semantics; bf16 (default) casts
    only the MXU operands and keeps f32 accumulation / f32 activations.
    """
    x = jnp.transpose(x_nchw, (0, 2, 3, 1))                  # NCHW -> NHWC
    for p in params:
        x = wrn_basic_block(x, p, matmul_dtype)
    return jnp.transpose(x, (0, 3, 1, 2))                    # NHWC -> NCHW


# ------------------------------- parameter init --------------------------------
def _bn_init(key, c):
    k1, k2, k3, k4 = jax.random.split(key, 4)
    gamma = 1.0 + 0.1 * jax.random.normal(k1, (c,), jnp.float32)
    beta = 0.1 * jax.random.normal(k2, (c,), jnp.float32)
    mean = 0.1 * jax.random.normal(k3, (c,), jnp.float32)
    var = 1.0 + 0.1 * jax.random.uniform(k4, (c,), jnp.float32)
    return (gamma, beta, mean, var)


def init_wrn_block_params(key, in_channels, out_channels, stride, num_basic_blocks):
    params = []
    c_in, s = in_channels, stride
    for _ in range(num_basic_blocks):
        key, kb1, kw1, kb2, kw2, ksc = jax.random.split(key, 6)
        no_shortcut = (c_in == out_channels) and (s == 1)
        p = {
            "stride": s,
            "bn1": _bn_init(kb1, c_in),
            "w1": 0.1 * jax.random.normal(kw1, (3, 3, c_in, out_channels), jnp.float32),
            "bn2": _bn_init(kb2, out_channels),
            "w2": 0.1 * jax.random.normal(kw2, (3, 3, out_channels, out_channels), jnp.float32),
        }
        if not no_shortcut:
            p["w_sc"] = 0.1 * jax.random.normal(ksc, (c_in, out_channels), jnp.float32)
        params.append(p)
        c_in, s = out_channels, 1
    return params


if __name__ == "__main__":
    key = jax.random.PRNGKey(0)
    kx, kp = jax.random.split(key)

    # Shapes consistent with WRNBlock(in=4, out=8, stride=2, num_basic_blocks=2).
    N, C_in, H, W = 2, 4, 16, 16
    C_out, stride, num_basic_blocks = 8, 2, 2

    x = jax.random.normal(kx, (N, C_in, H, W), jnp.float32)
    params = init_wrn_block_params(kp, C_in, C_out, stride, num_basic_blocks)

    forward = jax.jit(lambda inp: wrn_block_forward(inp, params))
    out = jax.block_until_ready(forward(x))

    assert out.shape == (N, C_out, H // stride, W // stride), out.shape
    assert bool(jnp.all(jnp.isfinite(out)))
    print("KERNEL_OK")
</pallas_src>

<mosaic_0001>
module attributes {stable_mosaic.version = 11 : i64} {
  func.func @_wrn_block_s2d_kernel(%arg0: i32, %arg1: memref<1x9x9x16xf32, #tpu.memory_space<vmem>>, %arg2: memref<1x8x8x4xf32, #tpu.memory_space<vmem>>, %arg3: memref<64x8xbf16, #tpu.memory_space<vmem>>, %arg4: memref<1x8xf32, #tpu.memory_space<vmem>>, %arg5: memref<1x8xf32, #tpu.memory_space<vmem>>, %arg6: memref<72x8xbf16, #tpu.memory_space<vmem>>, %arg7: memref<4x8xbf16, #tpu.memory_space<vmem>>, %arg8: memref<1x8x8x8xf32, #tpu.memory_space<vmem>>, %arg9: memref<10x10x8xf32, #tpu.memory_space<vmem>>) attributes {dimension_semantics = [#tpu.dimension_semantics<parallel>], iteration_bounds = array<i64: 2>, scalar_prefetch = 0 : i64, scratch_operands = 1 : i64, tpu.core_type = #tpu.core_type<tc>, window_params = [{transform_indices = @transform_0, window_bounds = array<i64: 1, 9, 9, 16>}, {transform_indices = @transform_1, window_bounds = array<i64: 1, 8, 8, 4>}, {pipeline_mode = #tpu.pipeline_mode<synchronous>, transform_indices = @transform_2, window_bounds = array<i64: 64, 8>}, {pipeline_mode = #tpu.pipeline_mode<synchronous>, transform_indices = @transform_3, window_bounds = array<i64: 1, 8>}, {pipeline_mode = #tpu.pipeline_mode<synchronous>, transform_indices = @transform_4, window_bounds = array<i64: 1, 8>}, {pipeline_mode = #tpu.pipeline_mode<synchronous>, transform_indices = @transform_5, window_bounds = array<i64: 72, 8>}, {pipeline_mode = #tpu.pipeline_mode<synchronous>, transform_indices = @transform_6, window_bounds = array<i64: 4, 8>}, {transform_indices = @transform_7, window_bounds = array<i64: 1, 8, 8, 8>}]} {
    %c0 = arith.constant 0 : index
    %c0_0 = arith.constant 0 : index
    %c0_1 = arith.constant 0 : index
    %c0_2 = arith.constant 0 : index
    %0 = vector.load %arg1[%c0, %c0_0, %c0_1, %c0_2] : memref<1x9x9x16xf32, #tpu.memory_space<vmem>>, vector<1x9x9x16xf32>
    %1 = vector.shape_cast %0 : vector<1x9x9x16xf32> to vector<9x9x16xf32>
    %2 = vector.extract_strided_slice %1 {offsets = [0, 0, 0], sizes = [8, 8, 16], strides = [1, 1, 1]} : vector<9x9x16xf32> to vector<8x8x16xf32>
    %3 = vector.shape_cast %2 : vector<8x8x16xf32> to vector<64x16xf32>
    %4 = vector.extract_strided_slice %1 {offsets = [0, 1, 0], sizes = [8, 8, 16], strides = [1, 1, 1]} : vector<9x9x16xf32> to vector<8x8x16xf32>
    %5 = vector.shape_cast %4 : vector<8x8x16xf32> to vector<64x16xf32>
    %6 = vector.extract_strided_slice %1 {offsets = [1, 0, 0], sizes = [8, 8, 16], strides = [1, 1, 1]} : vector<9x9x16xf32> to vector<8x8x16xf32>
    %7 = vector.shape_cast %6 : vector<8x8x16xf32> to vector<64x16xf32>
    %8 = vector.extract_strided_slice %1 {offsets = [1, 1, 0], sizes = [8, 8, 16], strides = [1, 1, 1]} : vector<9x9x16xf32> to vector<8x8x16xf32>
    %9 = vector.shape_cast %8 : vector<8x8x16xf32> to vector<64x16xf32>
    %10 = tpu.concatenate %3, %5, %7, %9 in 1 : vector<64x16xf32>, vector<64x16xf32>, vector<64x16xf32>, vector<64x16xf32> -> vector<64x64xf32>
    %11 = arith.truncf %10 : vector<64x64xf32> to vector<64x64xbf16>
    %c0_3 = arith.constant 0 : index
    %c0_4 = arith.constant 0 : index
    %12 = vector.load %arg3[%c0_3, %c0_4] : memref<64x8xbf16, #tpu.memory_space<vmem>>, vector<64x8xbf16>
    %cst = arith.constant dense<0.000000e+00> : vector<64x8xf32>
    %13 = tpu.matmul %11, %12, %cst {dimension_numbers = #tpu.dot_dimension_numbers<[1], [0], [0], [1], [0, 0, 1, 1], [], []>} : vector<64x64xbf16>, vector<64x8xbf16>, vector<64x8xf32> -> vector<64x8xf32>
    %c0_5 = arith.constant 0 : index
    %c0_6 = arith.constant 0 : index
    %c0_7 = arith.constant 0 : index
    %c0_8 = arith.constant 0 : index
    %14 = vector.load %arg2[%c0_5, %c0_6, %c0_7, %c0_8] : memref<1x8x8x4xf32, #tpu.memory_space<vmem>>, vector<1x8x8x4xf32>
    %15 = vector.shape_cast %14 : vector<1x8x8x4xf32> to vector<8x8x4xf32>
    %16 = vector.shape_cast %15 : vector<8x8x4xf32> to vector<64x4xf32>
    %17 = arith.truncf %16 : vector<64x4xf32> to vector<64x4xbf16>
    %c0_9 = arith.constant 0 : index
    %c0_10 = arith.constant 0 : index
    %18 = vector.load %arg7[%c0_9, %c0_10] : memref<4x8xbf16, #tpu.memory_space<vmem>>, vector<4x8xbf16>
    %cst_11 = arith.constant dense<0.000000e+00> : vector<64x8xf32>
    %19 = tpu.matmul %17, %18, %cst_11 {dimension_numbers = #tpu.dot_dimension_numbers<[1], [0], [0], [1], [0, 0, 1, 1], [], []>} : vector<64x4xbf16>, vector<4x8xbf16>, vector<64x8xf32> -> vector<64x8xf32>
    %c0_12 = arith.constant 0 : index
    %c0_13 = arith.constant 0 : index
    %20 = vector.load %arg4[%c0_12, %c0_13] : memref<1x8xf32, #tpu.memory_space<vmem>>, vector<1x8xf32>
    %c0_14 = arith.constant 0 : index
    %c0_15 = arith.constant 0 : index
    %21 = vector.load %arg5[%c0_14, %c0_15] : memref<1x8xf32, #tpu.memory_space<vmem>>, vector<1x8xf32>
    %22 = vector.broadcast %20 : vector<1x8xf32> to vector<64x8xf32>
    %23 = arith.mulf %13, %22 : vector<64x8xf32>
    %24 = vector.broadcast %21 : vector<1x8xf32> to vector<64x8xf32>
    %25 = arith.addf %23, %24 : vector<64x8xf32>
    %cst_16 = arith.constant 0.000000e+00 : f32
    %26 = vector.broadcast %cst_16 : f32 to vector<64x8xf32>
    %27 = arith.maximumf %25, %26 : vector<64x8xf32>
    %cst_17 = arith.constant 0.000000e+00 : f32
    %28 = vector.broadcast %cst_17 : f32 to vector<10x10x8xf32>
    %c0_18 = arith.constant 0 : index
    %c0_19 = arith.constant 0 : index
    %c0_20 = arith.constant 0 : index
    %29 = vector.load %arg9[%c0_18, %c0_19, %c0_20] : memref<10x10x8xf32, #tpu.memory_space<vmem>>, vector<10x10x8xf32>
    tpu.vector_store %arg9[%c0_18, %c0_19, %c0_20], %28 {strides = array<i32>} : memref<10x10x8xf32, #tpu.memory_space<vmem>>, vector<10x10x8xf32>,
    %30 = vector.shape_cast %27 : vector<64x8xf32> to vector<8x8x8xf32>
    %c1 = arith.constant 1 : index
    %c1_21 = arith.constant 1 : index
    %c0_22 = arith.constant 0 : index
    %31 = vector.load %arg9[%c1, %c1_21, %c0_22] : memref<10x10x8xf32, #tpu.memory_space<vmem>>, vector<8x8x8xf32>
    tpu.vector_store %arg9[%c1, %c1_21, %c0_22], %30 {strides = array<i32>} : memref<10x10x8xf32, #tpu.memory_space<vmem>>, vector<8x8x8xf32>,
    %c0_23 = arith.constant 0 : index
    %c0_24 = arith.constant 0 : index
    %c0_25 = arith.constant 0 : index
    %32 = vector.load %arg9[%c0_23, %c0_24, %c0_25] : memref<10x10x8xf32, #tpu.memory_space<vmem>>, vector<8x8x8xf32>
    %33 = vector.shape_cast %32 : vector<8x8x8xf32> to vector<64x8xf32>
    %c0_26 = arith.constant 0 : index
    %c1_27 = arith.constant 1 : index
    %c0_28 = arith.constant 0 : index
    %34 = vector.load %arg9[%c0_26, %c1_27, %c0_28] : memref<10x10x8xf32, #tpu.memory_space<vmem>>, vector<8x8x8xf32>
    %35 = vector.shape_cast %34 : vector<8x8x8xf32> to vector<64x8xf32>
    %c0_29 = arith.constant 0 : index
    %c2 = arith.constant 2 : index
    %c0_30 = arith.constant 0 : index
    %36 = vector.load %arg9[%c0_29, %c2, %c0_30] : memref<10x10x8xf32, #tpu.memory_space<vmem>>, vector<8x8x8xf32>
    %37 = vector.shape_cast %36 : vector<8x8x8xf32> to vector<64x8xf32>
    %c1_31 = arith.constant 1 : index
    %c0_32 = arith.constant 0 : index
    %c0_33 = arith.constant 0 : index
    %38 = vector.load %arg9[%c1_31, %c0_32, %c0_33] : memref<10x10x8xf32, #tpu.memory_space<vmem>>, vector<8x8x8xf32>
    %39 = vector.shape_cast %38 : vector<8x8x8xf32> to vector<64x8xf32>
    %c1_34 = arith.constant 1 : index
    %c1_35 = arith.constant 1 : index
    %c0_36 = arith.constant 0 : index
    %40 = vector.load %arg9[%c1_34, %c1_35, %c0_36] : memref<10x10x8xf32, #tpu.memory_space<vmem>>, vector<8x8x8xf32>
    %41 = vector.shape_cast %40 : vector<8x8x8xf32> to vector<64x8xf32>
    %c1_37 = arith.constant 1 : index
    %c2_38 = arith.constant 2 : index
    %c0_39 = arith.constant 0 : index
    %42 = vector.load %arg9[%c1_37, %c2_38, %c0_39] : memref<10x10x8xf32, #tpu.memory_space<vmem>>, vector<8x8x8xf32>
    %43 = vector.shape_cast %42 : vector<8x8x8xf32> to vector<64x8xf32>
    %c2_40 = arith.constant 2 : index
    %c0_41 = arith.constant 0 : index
    %c0_42 = arith.constant 0 : index
    %44 = vector.load %arg9[%c2_40, %c0_41, %c0_42] : memref<10x10x8xf32, #tpu.memory_space<vmem>>, vector<8x8x8xf32>
    %45 = vector.shape_cast %44 : vector<8x8x8xf32> to vector<64x8xf32>
    %c2_43 = arith.constant 2 : index
    %c1_44 = arith.constant 1 : index
    %c0_45 = arith.constant 0 : index
    %46 = vector.load %arg9[%c2_43, %c1_44, %c0_45] : memref<10x10x8xf32, #tpu.memory_space<vmem>>, vector<8x8x8xf32>
    %47 = vector.shape_cast %46 : vector<8x8x8xf32> to vector<64x8xf32>
    %c2_46 = arith.constant 2 : index
    %c2_47 = arith.constant 2 : index
    %c0_48 = arith.constant 0 : index
    %48 = vector.load %arg9[%c2_46, %c2_47, %c0_48] : memref<10x10x8xf32, #tpu.memory_space<vmem>>, vector<8x8x8xf32>
    %49 = vector.shape_cast %48 : vector<8x8x8xf32> to vector<64x8xf32>
    %50 = tpu.concatenate %33, %35, %37, %39, %41, %43, %45, %47, %49 in 1 : vector<64x8xf32>, vector<64x8xf32>, vector<64x8xf32>, vector<64x8xf32>, vector<64x8xf32>, vector<64x8xf32>, vector<64x8xf32>, vector<64x8xf32>, vector<64x8xf32> -> vector<64x72xf32>
    %51 = arith.truncf %50 : vector<64x72xf32> to vector<64x72xbf16>
    %c0_49 = arith.constant 0 : index
    %c0_50 = arith.constant 0 : index
    %52 = vector.load %arg6[%c0_49, %c0_50] : memref<72x8xbf16, #tpu.memory_space<vmem>>, vector<72x8xbf16>
    %cst_51 = arith.constant dense<0.000000e+00> : vector<64x8xf32>
    %53 = tpu.matmul %51, %52, %cst_51 {dimension_numbers = #tpu.dot_dimension_numbers<[1], [0], [0], [1], [0, 0, 1, 1], [], []>} : vector<64x72xbf16>, vector<72x8xbf16>, vector<64x8xf32> -> vector<64x8xf32>
    %54 = arith.addf %53, %19 : vector<64x8xf32>
    %55 = vector.shape_cast %54 : vector<64x8xf32> to vector<8x8x8xf32>
    %c0_52 = arith.constant 0 : index
    %c0_53 = arith.constant 0 : index
    %c0_54 = arith.constant 0 : index
    %c0_55 = arith.constant 0 : index
    %56 = vector.load %arg8[%c0_52, %c0_53, %c0_54, %c0_55] : memref<1x8x8x8xf32, #tpu.memory_space<vmem>>, vector<1x8x8x8xf32>
    %57 = vector.shape_cast %56 : vector<1x8x8x8xf32> to vector<8x8x8xf32>
    %58 = vector.shape_cast %55 : vector<8x8x8xf32> to vector<1x8x8x8xf32>
    tpu.vector_store %arg8[%c0_52, %c0_53, %c0_54, %c0_55], %58 {strides = array<i32>} : memref<1x8x8x8xf32, #tpu.memory_space<vmem>>, vector<1x8x8x8xf32>,
    return
  }
  func.func @transform_0(%arg0: i32) -> (i32, i32, i32, i32) {
    %c0_i32 = arith.constant 0 : i32
    %c0_i32_0 = arith.constant 0 : i32
    %c0_i32_1 = arith.constant 0 : i32
    %c0_i32_2 = arith.constant 0 : i32
    return %arg0, %c0_i32, %c0_i32_0, %c0_i32_1 : i32, i32, i32, i32
  }
  func.func @transform_1(%arg0: i32) -> (i32, i32, i32, i32) {
    %c0_i32 = arith.constant 0 : i32
    %c0_i32_0 = arith.constant 0 : i32
    %c0_i32_1 = arith.constant 0 : i32
    %c0_i32_2 = arith.constant 0 : i32
    return %arg0, %c0_i32, %c0_i32_0, %c0_i32_1 : i32, i32, i32, i32
  }
  func.func @transform_2(%arg0: i32) -> (i32, i32) {
    %c0_i32 = arith.constant 0 : i32
    %c0_i32_0 = arith.constant 0 : i32
    %c0_i32_1 = arith.constant 0 : i32
    return %c0_i32, %c0_i32_0 : i32, i32
  }
  func.func @transform_3(%arg0: i32) -> (i32, i32) {
    %c0_i32 = arith.constant 0 : i32
    %c0_i32_0 = arith.constant 0 : i32
    %c0_i32_1 = arith.constant 0 : i32
    return %c0_i32, %c0_i32_0 : i32, i32
  }
  func.func @transform_4(%arg0: i32) -> (i32, i32) {
    %c0_i32 = arith.constant 0 : i32
    %c0_i32_0 = arith.constant 0 : i32
    %c0_i32_1 = arith.constant 0 : i32
    return %c0_i32, %c0_i32_0 : i32, i32
  }
  func.func @transform_5(%arg0: i32) -> (i32, i32) {
    %c0_i32 = arith.constant 0 : i32
    %c0_i32_0 = arith.constant 0 : i32
    %c0_i32_1 = arith.constant 0 : i32
    return %c0_i32, %c0_i32_0 : i32, i32
  }
  func.func @transform_6(%arg0: i32) -> (i32, i32) {
    %c0_i32 = arith.constant 0 : i32
    %c0_i32_0 = arith.constant 0 : i32
    %c0_i32_1 = arith.constant 0 : i32
    return %c0_i32, %c0_i32_0 : i32, i32
  }
  func.func @transform_7(%arg0: i32) -> (i32, i32, i32, i32) {
    %c0_i32 = arith.constant 0 : i32
    %c0_i32_0 = arith.constant 0 : i32
    %c0_i32_1 = arith.constant 0 : i32
    %c0_i32_2 = arith.constant 0 : i32
    return %arg0, %c0_i32, %c0_i32_0, %c0_i32_1 : i32, i32, i32, i32
  }
}

module attributes {stable_mosaic.version = 11 : i64} {
  func.func @_wrn_block_stride1_kernel(%arg0: i32, %arg1: memref<1x8x8x8xf32, #tpu.memory_space<vmem>>, %arg2: memref<1x8xf32, #tpu.memory_space<vmem>>, %arg3: memref<1x8xf32, #tpu.memory_space<vmem>>, %arg4: memref<72x8xbf16, #tpu.memory_space<vmem>>, %arg5: memref<1x8xf32, #tpu.memory_space<vmem>>, %arg6: memref<1x8xf32, #tpu.memory_space<vmem>>, %arg7: memref<72x8xbf16, #tpu.memory_space<vmem>>, %arg8: memref<1x8x8x8xf32, #tpu.memory_space<vmem>>, %arg9: memref<10x10x8xf32, #tpu.memory_space<vmem>>, %arg10: memref<10x10x8xf32, #tpu.memory_space<vmem>>) attributes {dimension_semantics = [#tpu.dimension_semantics<parallel>], iteration_bounds = array<i64: 2>, scalar_prefetch = 0 : i64, scratch_operands = 2 : i64, tpu.core_type = #tpu.core_type<tc>, window_params = [{transform_indices = @transform_0, window_bounds = array<i64: 1, 8, 8, 8>}, {pipeline_mode = #tpu.pipeline_mode<synchronous>, transform_indices = @transform_1, window_bounds = array<i64: 1, 8>}, {pipeline_mode = #tpu.pipeline_mode<synchronous>, transform_indices = @transform_2, window_bounds = array<i64: 1, 8>}, {pipeline_mode = #tpu.pipeline_mode<synchronous>, transform_indices = @transform_3, window_bounds = array<i64: 72, 8>}, {pipeline_mode = #tpu.pipeline_mode<synchronous>, transform_indices = @transform_4, window_bounds = array<i64: 1, 8>}, {pipeline_mode = #tpu.pipeline_mode<synchronous>, transform_indices = @transform_5, window_bounds = array<i64: 1, 8>}, {pipeline_mode = #tpu.pipeline_mode<synchronous>, transform_indices = @transform_6, window_bounds = array<i64: 72, 8>}, {transform_indices = @transform_7, window_bounds = array<i64: 1, 8, 8, 8>}]} {
    %c0 = arith.constant 0 : index
    %c0_0 = arith.constant 0 : index
    %c0_1 = arith.constant 0 : index
    %c0_2 = arith.constant 0 : index
    %0 = vector.load %arg1[%c0, %c0_0, %c0_1, %c0_2] : memref<1x8x8x8xf32, #tpu.memory_space<vmem>>, vector<1x8x8x8xf32>
    %1 = vector.shape_cast %0 : vector<1x8x8x8xf32> to vector<8x8x8xf32>
    %c0_3 = arith.constant 0 : index
    %c0_4 = arith.constant 0 : index
    %2 = vector.load %arg2[%c0_3, %c0_4] : memref<1x8xf32, #tpu.memory_space<vmem>>, vector<1x8xf32>
    %3 = vector.shape_cast %2 : vector<1x8xf32> to vector<1x1x8xf32>
    %4 = vector.broadcast %3 : vector<1x1x8xf32> to vector<8x8x8xf32>
    %5 = arith.mulf %1, %4 : vector<8x8x8xf32>
    %c0_5 = arith.constant 0 : index
    %c0_6 = arith.constant 0 : index
    %6 = vector.load %arg3[%c0_5, %c0_6] : memref<1x8xf32, #tpu.memory_space<vmem>>, vector<1x8xf32>
    %7 = vector.shape_cast %6 : vector<1x8xf32> to vector<1x1x8xf32>
    %8 = vector.broadcast %7 : vector<1x1x8xf32> to vector<8x8x8xf32>
    %9 = arith.addf %5, %8 : vector<8x8x8xf32>
    %cst = arith.constant 0.000000e+00 : f32
    %10 = vector.broadcast %cst : f32 to vector<8x8x8xf32>
    %11 = arith.maximumf %9, %10 : vector<8x8x8xf32>
    %cst_7 = arith.constant 0.000000e+00 : f32
    %12 = vector.broadcast %cst_7 : f32 to vector<10x10x8xf32>
    %c0_8 = arith.constant 0 : index
    %c0_9 = arith.constant 0 : index
    %c0_10 = arith.constant 0 : index
    %13 = vector.load %arg9[%c0_8, %c0_9, %c0_10] : memref<10x10x8xf32, #tpu.memory_space<vmem>>, vector<10x10x8xf32>
    tpu.vector_store %arg9[%c0_8, %c0_9, %c0_10], %12 {strides = array<i32>} : memref<10x10x8xf32, #tpu.memory_space<vmem>>, vector<10x10x8xf32>,
    %c1 = arith.constant 1 : index
    %c1_11 = arith.constant 1 : index
    %c0_12 = arith.constant 0 : index
    %14 = vector.load %arg9[%c1, %c1_11, %c0_12] : memref<10x10x8xf32, #tpu.memory_space<vmem>>, vector<8x8x8xf32>
    tpu.vector_store %arg9[%c1, %c1_11, %c0_12], %11 {strides = array<i32>} : memref<10x10x8xf32, #tpu.memory_space<vmem>>, vector<8x8x8xf32>,
    %c0_13 = arith.constant 0 : index
    %c0_14 = arith.constant 0 : index
    %c0_15 = arith.constant 0 : index
    %15 = vector.load %arg9[%c0_13, %c0_14, %c0_15] : memref<10x10x8xf32, #tpu.memory_space<vmem>>, vector<8x8x8xf32>
    %16 = vector.shape_cast %15 : vector<8x8x8xf32> to vector<64x8xf32>
    %c0_16 = arith.constant 0 : index
    %c1_17 = arith.constant 1 : index
    %c0_18 = arith.constant 0 : index
    %17 = vector.load %arg9[%c0_16, %c1_17, %c0_18] : memref<10x10x8xf32, #tpu.memory_space<vmem>>, vector<8x8x8xf32>
    %18 = vector.shape_cast %17 : vector<8x8x8xf32> to vector<64x8xf32>
    %c0_19 = arith.constant 0 : index
    %c2 = arith.constant 2 : index
    %c0_20 = arith.constant 0 : index
    %19 = vector.load %arg9[%c0_19, %c2, %c0_20] : memref<10x10x8xf32, #tpu.memory_space<vmem>>, vector<8x8x8xf32>
    %20 = vector.shape_cast %19 : vector<8x8x8xf32> to vector<64x8xf32>
    %c1_21 = arith.constant 1 : index
    %c0_22 = arith.constant 0 : index
    %c0_23 = arith.constant 0 : index
    %21 = vector.load %arg9[%c1_21, %c0_22, %c0_23] : memref<10x10x8xf32, #tpu.memory_space<vmem>>, vector<8x8x8xf32>
    %22 = vector.shape_cast %21 : vector<8x8x8xf32> to vector<64x8xf32>
    %c1_24 = arith.constant 1 : index
    %c1_25 = arith.constant 1 : index
    %c0_26 = arith.constant 0 : index
    %23 = vector.load %arg9[%c1_24, %c1_25, %c0_26] : memref<10x10x8xf32, #tpu.memory_space<vmem>>, vector<8x8x8xf32>
    %24 = vector.shape_cast %23 : vector<8x8x8xf32> to vector<64x8xf32>
    %c1_27 = arith.constant 1 : index
    %c2_28 = arith.constant 2 : index
    %c0_29 = arith.constant 0 : index
    %25 = vector.load %arg9[%c1_27, %c2_28, %c0_29] : memref<10x10x8xf32, #tpu.memory_space<vmem>>, vector<8x8x8xf32>
    %26 = vector.shape_cast %25 : vector<8x8x8xf32> to vector<64x8xf32>
    %c2_30 = arith.constant 2 : index
    %c0_31 = arith.constant 0 : index
    %c0_32 = arith.constant 0 : index
    %27 = vector.load %arg9[%c2_30, %c0_31, %c0_32] : memref<10x10x8xf32, #tpu.memory_space<vmem>>, vector<8x8x8xf32>
    %28 = vector.shape_cast %27 : vector<8x8x8xf32> to vector<64x8xf32>
    %c2_33 = arith.constant 2 : index
    %c1_34 = arith.constant 1 : index
    %c0_35 = arith.constant 0 : index
    %29 = vector.load %arg9[%c2_33, %c1_34, %c0_35] : memref<10x10x8xf32, #tpu.memory_space<vmem>>, vector<8x8x8xf32>
    %30 = vector.shape_cast %29 : vector<8x8x8xf32> to vector<64x8xf32>
    %c2_36 = arith.constant 2 : index
    %c2_37 = arith.constant 2 : index
    %c0_38 = arith.constant 0 : index
    %31 = vector.load %arg9[%c2_36, %c2_37, %c0_38] : memref<10x10x8xf32, #tpu.memory_space<vmem>>, vector<8x8x8xf32>
    %32 = vector.shape_cast %31 : vector<8x8x8xf32> to vector<64x8xf32>
    %33 = tpu.concatenate %16, %18, %20, %22, %24, %26, %28, %30, %32 in 1 : vector<64x8xf32>, vector<64x8xf32>, vector<64x8xf32>, vector<64x8xf32>, vector<64x8xf32>, vector<64x8xf32>, vector<64x8xf32>, vector<64x8xf32>, vector<64x8xf32> -> vector<64x72xf32>
    %34 = arith.truncf %33 : vector<64x72xf32> to vector<64x72xbf16>
    %c0_39 = arith.constant 0 : index
    %c0_40 = arith.constant 0 : index
    %35 = vector.load %arg4[%c0_39, %c0_40] : memref<72x8xbf16, #tpu.memory_space<vmem>>, vector<72x8xbf16>
    %cst_41 = arith.constant dense<0.000000e+00> : vector<64x8xf32>
    %36 = tpu.matmul %34, %35, %cst_41 {dimension_numbers = #tpu.dot_dimension_numbers<[1], [0], [0], [1], [0, 0, 1, 1], [], []>} : vector<64x72xbf16>, vector<72x8xbf16>, vector<64x8xf32> -> vector<64x8xf32>
    %37 = vector.shape_cast %11 : vector<8x8x8xf32> to vector<64x8xf32>
    %c0_42 = arith.constant 0 : index
    %c0_43 = arith.constant 0 : index
    %38 = vector.load %arg5[%c0_42, %c0_43] : memref<1x8xf32, #tpu.memory_space<vmem>>, vector<1x8xf32>
    %c0_44 = arith.constant 0 : index
    %c0_45 = arith.constant 0 : index
    %39 = vector.load %arg6[%c0_44, %c0_45] : memref<1x8xf32, #tpu.memory_space<vmem>>, vector<1x8xf32>
    %40 = vector.broadcast %38 : vector<1x8xf32> to vector<64x8xf32>
    %41 = arith.mulf %36, %40 : vector<64x8xf32>
    %42 = vector.broadcast %39 : vector<1x8xf32> to vector<64x8xf32>
    %43 = arith.addf %41, %42 : vector<64x8xf32>
    %cst_46 = arith.constant 0.000000e+00 : f32
    %44 = vector.broadcast %cst_46 : f32 to vector<64x8xf32>
    %45 = arith.maximumf %43, %44 : vector<64x8xf32>
    %cst_47 = arith.constant 0.000000e+00 : f32
    %46 = vector.broadcast %cst_47 : f32 to vector<10x10x8xf32>
    %c0_48 = arith.constant 0 : index
    %c0_49 = arith.constant 0 : index
    %c0_50 = arith.constant 0 : index
    %47 = vector.load %arg10[%c0_48, %c0_49, %c0_50] : memref<10x10x8xf32, #tpu.memory_space<vmem>>, vector<10x10x8xf32>
    tpu.vector_store %arg10[%c0_48, %c0_49, %c0_50], %46 {strides = array<i32>} : memref<10x10x8xf32, #tpu.memory_space<vmem>>, vector<10x10x8xf32>,
    %48 = vector.shape_cast %45 : vector<64x8xf32> to vector<8x8x8xf32>
    %c1_51 = arith.constant 1 : index
    %c1_52 = arith.constant 1 : index
    %c0_53 = arith.constant 0 : index
    %49 = vector.load %arg10[%c1_51, %c1_52, %c0_53] : memref<10x10x8xf32, #tpu.memory_space<vmem>>, vector<8x8x8xf32>
    tpu.vector_store %arg10[%c1_51, %c1_52, %c0_53], %48 {strides = array<i32>} : memref<10x10x8xf32, #tpu.memory_space<vmem>>, vector<8x8x8xf32>,
    %c0_54 = arith.constant 0 : index
    %c0_55 = arith.constant 0 : index
    %c0_56 = arith.constant 0 : index
    %50 = vector.load %arg10[%c0_54, %c0_55, %c0_56] : memref<10x10x8xf32, #tpu.memory_space<vmem>>, vector<8x8x8xf32>
    %51 = vector.shape_cast %50 : vector<8x8x8xf32> to vector<64x8xf32>
    %c0_57 = arith.constant 0 : index
    %c1_58 = arith.constant 1 : index
    %c0_59 = arith.constant 0 : index
    %52 = vector.load %arg10[%c0_57, %c1_58, %c0_59] : memref<10x10x8xf32, #tpu.memory_space<vmem>>, vector<8x8x8xf32>
    %53 = vector.shape_cast %52 : vector<8x8x8xf32> to vector<64x8xf32>
    %c0_60 = arith.constant 0 : index
    %c2_61 = arith.constant 2 : index
    %c0_62 = arith.constant 0 : index
    %54 = vector.load %arg10[%c0_60, %c2_61, %c0_62] : memref<10x10x8xf32, #tpu.memory_space<vmem>>, vector<8x8x8xf32>
    %55 = vector.shape_cast %54 : vector<8x8x8xf32> to vector<64x8xf32>
    %c1_63 = arith.constant 1 : index
    %c0_64 = arith.constant 0 : index
    %c0_65 = arith.constant 0 : index
    %56 = vector.load %arg10[%c1_63, %c0_64, %c0_65] : memref<10x10x8xf32, #tpu.memory_space<vmem>>, vector<8x8x8xf32>
    %57 = vector.shape_cast %56 : vector<8x8x8xf32> to vector<64x8xf32>
    %c1_66 = arith.constant 1 : index
    %c1_67 = arith.constant 1 : index
    %c0_68 = arith.constant 0 : index
    %58 = vector.load %arg10[%c1_66, %c1_67, %c0_68] : memref<10x10x8xf32, #tpu.memory_space<vmem>>, vector<8x8x8xf32>
    %59 = vector.shape_cast %58 : vector<8x8x8xf32> to vector<64x8xf32>
    %c1_69 = arith.constant 1 : index
    %c2_70 = arith.constant 2 : index
    %c0_71 = arith.constant 0 : index
    %60 = vector.load %arg10[%c1_69, %c2_70, %c0_71] : memref<10x10x8xf32, #tpu.memory_space<vmem>>, vector<8x8x8xf32>
    %61 = vector.shape_cast %60 : vector<8x8x8xf32> to vector<64x8xf32>
    %c2_72 = arith.constant 2 : index
    %c0_73 = arith.constant 0 : index
    %c0_74 = arith.constant 0 : index
    %62 = vector.load %arg10[%c2_72, %c0_73, %c0_74] : memref<10x10x8xf32, #tpu.memory_space<vmem>>, vector<8x8x8xf32>
    %63 = vector.shape_cast %62 : vector<8x8x8xf32> to vector<64x8xf32>
    %c2_75 = arith.constant 2 : index
    %c1_76 = arith.constant 1 : index
    %c0_77 = arith.constant 0 : index
    %64 = vector.load %arg10[%c2_75, %c1_76, %c0_77] : memref<10x10x8xf32, #tpu.memory_space<vmem>>, vector<8x8x8xf32>
    %65 = vector.shape_cast %64 : vector<8x8x8xf32> to vector<64x8xf32>
    %c2_78 = arith.constant 2 : index
    %c2_79 = arith.constant 2 : index
    %c0_80 = arith.constant 0 : index
    %66 = vector.load %arg10[%c2_78, %c2_79, %c0_80] : memref<10x10x8xf32, #tpu.memory_space<vmem>>, vector<8x8x8xf32>
    %67 = vector.shape_cast %66 : vector<8x8x8xf32> to vector<64x8xf32>
    %68 = tpu.concatenate %51, %53, %55, %57, %59, %61, %63, %65, %67 in 1 : vector<64x8xf32>, vector<64x8xf32>, vector<64x8xf32>, vector<64x8xf32>, vector<64x8xf32>, vector<64x8xf32>, vector<64x8xf32>, vector<64x8xf32>, vector<64x8xf32> -> vector<64x72xf32>
    %69 = arith.truncf %68 : vector<64x72xf32> to vector<64x72xbf16>
    %c0_81 = arith.constant 0 : index
    %c0_82 = arith.constant 0 : index
    %70 = vector.load %arg7[%c0_81, %c0_82] : memref<72x8xbf16, #tpu.memory_space<vmem>>, vector<72x8xbf16>
    %cst_83 = arith.constant dense<0.000000e+00> : vector<64x8xf32>
    %71 = tpu.matmul %69, %70, %cst_83 {dimension_numbers = #tpu.dot_dimension_numbers<[1], [0], [0], [1], [0, 0, 1, 1], [], []>} : vector<64x72xbf16>, vector<72x8xbf16>, vector<64x8xf32> -> vector<64x8xf32>
    %72 = arith.addf %71, %37 : vector<64x8xf32>
    %73 = vector.shape_cast %72 : vector<64x8xf32> to vector<8x8x8xf32>
    %c0_84 = arith.constant 0 : index
    %c0_85 = arith.constant 0 : index
    %c0_86 = arith.constant 0 : index
    %c0_87 = arith.constant 0 : index
    %74 = vector.load %arg8[%c0_84, %c0_85, %c0_86, %c0_87] : memref<1x8x8x8xf32, #tpu.memory_space<vmem>>, vector<1x8x8x8xf32>
    %75 = vector.shape_cast %74 : vector<1x8x8x8xf32> to vector<8x8x8xf32>
    %76 = vector.shape_cast %73 : vector<8x8x8xf32> to vector<1x8x8x8xf32>
    tpu.vector_store %arg8[%c0_84, %c0_85, %c0_86, %c0_87], %76 {strides = array<i32>} : memref<1x8x8x8xf32, #tpu.memory_space<vmem>>, vector<1x8x8x8xf32>,
    return
  }
  func.func @transform_0(%arg0: i32) -> (i32, i32, i32, i32) {
    %c0_i32 = arith.constant 0 : i32
    %c0_i32_0 = arith.constant 0 : i32
    %c0_i32_1 = arith.constant 0 : i32
    %c0_i32_2 = arith.constant 0 : i32
    return %arg0, %c0_i32, %c0_i32_0, %c0_i32_1 : i32, i32, i32, i32
  }
  func.func @transform_1(%arg0: i32) -> (i32, i32) {
    %c0_i32 = arith.constant 0 : i32
    %c0_i32_0 = arith.constant 0 : i32
    %c0_i32_1 = arith.constant 0 : i32
    return %c0_i32, %c0_i32_0 : i32, i32
  }
  func.func @transform_2(%arg0: i32) -> (i32, i32) {
    %c0_i32 = arith.constant 0 : i32
    %c0_i32_0 = arith.constant 0 : i32
    %c0_i32_1 = arith.constant 0 : i32
    return %c0_i32, %c0_i32_0 : i32, i32
  }
  func.func @transform_3(%arg0: i32) -> (i32, i32) {
    %c0_i32 = arith.constant 0 : i32
    %c0_i32_0 = arith.constant 0 : i32
    %c0_i32_1 = arith.constant 0 : i32
    return %c0_i32, %c0_i32_0 : i32, i32
  }
  func.func @transform_4(%arg0: i32) -> (i32, i32) {
    %c0_i32 = arith.constant 0 : i32
    %c0_i32_0 = arith.constant 0 : i32
    %c0_i32_1 = arith.constant 0 : i32
    return %c0_i32, %c0_i32_0 : i32, i32
  }
  func.func @transform_5(%arg0: i32) -> (i32, i32) {
    %c0_i32 = arith.constant 0 : i32
    %c0_i32_0 = arith.constant 0 : i32
    %c0_i32_1 = arith.constant 0 : i32
    return %c0_i32, %c0_i32_0 : i32, i32
  }
  func.func @transform_6(%arg0: i32) -> (i32, i32) {
    %c0_i32 = arith.constant 0 : i32
    %c0_i32_0 = arith.constant 0 : i32
    %c0_i32_1 = arith.constant 0 : i32
    return %c0_i32, %c0_i32_0 : i32, i32
  }
  func.func @transform_7(%arg0: i32) -> (i32, i32, i32, i32) {
    %c0_i32 = arith.constant 0 : i32
    %c0_i32_0 = arith.constant 0 : i32
    %c0_i32_1 = arith.constant 0 : i32
    %c0_i32_2 = arith.constant 0 : i32
    return %arg0, %c0_i32, %c0_i32_0, %c0_i32_1 : i32, i32, i32, i32
  }
}

</mosaic_0001>

<llo_original>
// kernel: _lambda_.2
$region0: #{_lambda_.2}
  #allocation0 [shape = 'u32[]', space=smem, size = 0x4, offset = 0x4, fixed_abs, tag = 'smem constant byte address 0x4 - core index']
  #allocation1 [shape = 'u32[144,128]{1,0:T(1,128)}', space=vmem, size = 0x12000, scoped, tag = 'internal scratch']
  #allocation2 [shape = 'f32[10,10,8]{2,1,0:T(8,128)}', space=vmem, size = 0x14000, scoped, tag = 'scratch operand']
  %s0 = inlined_call_operand.vmem [shape: f32[2,9,9,16], index: 0, kind: input, shape index: {}]
  %s1 = inlined_call_operand.vmem [shape: f32[2,8,8,4], index: 1, kind: input, shape index: {}]
  %s2 = inlined_call_operand.vmem [shape: bf16[64,8], index: 2, kind: input, shape index: {}]
  %s3 = inlined_call_operand.vmem [shape: f32[1,8], index: 3, kind: input, shape index: {}]
  %s4 = inlined_call_operand.vmem [shape: f32[1,8], index: 4, kind: input, shape index: {}]
  %s5 = inlined_call_operand.vmem [shape: bf16[72,8], index: 5, kind: input, shape index: {}]
  %s6 = inlined_call_operand.vmem [shape: bf16[4,8], index: 6, kind: input, shape index: {}]
  %s7 = inlined_call_operand.vmem [shape: f32[2,8,8,8], index: 7, kind: output, shape index: {}]
  %s8 = sld [smem:[#allocation0]]
  $region61: #{_lambda_.2} parent=0
    _
  %s10 = ssub.s32 1, %s8
  %s11 = scalar_select 0, %s10, %s8
  loop: start=0, step=1, limit=4
  $region2: #{_lambda_.2} parent=0 // loop_pre_header
    _
  $region3: #{_lambda_.2} parent=0 // loop_header
    %s13 = sphi 0, %s17
    %p14 = scmp.ge.s32.totalorder %s13, 4
    %s23 = sphi 0, %s25
    %s26 = sphi 0, %s23
    %s27 = sphi 0, %s26
    %s43 = sphi 0, %s27
    %s49 = sphi 0, %s51
    %s52 = sphi 0, %s49
    %s53 = sphi 0, %s52
    %s69 = sphi 0, %s53
    %s73 = sphi 0, %s73
    %s75 = sphi 0, %s73
    %s76 = sphi 0, %s75
    %s90 = sphi 0, %s76
    %s94 = sphi 0, %s94
    %s96 = sphi 0, %s94
    %s97 = sphi 0, %s96
    %s111 = sphi 0, %s97
    %s115 = sphi 0, %s115
    %s117 = sphi 0, %s115
    %s118 = sphi 0, %s117
    %s132 = sphi 0, %s118
    %s136 = sphi 0, %s136
    %s138 = sphi 0, %s136
    %s139 = sphi 0, %s138
    %s153 = sphi 0, %s139
    %s157 = sphi 0, %s157
    %s159 = sphi 0, %s157
    %s160 = sphi 0, %s159
    %s174 = sphi 0, %s160
    %s180 = sphi 0, %s182
    %s183 = sphi 0, %s180
    %s184 = sphi 0, %s183
    %s200 = sphi 0, %s184
  $region4: #{_lambda_.2} parent=0 // loop_header_branch
    %16 = sbr.rel (%p14) target = $region8
  $region5: #{_lambda_.2} parent=0 // loop_body
    %s18 = ssub.s32 %s13, 1
    %s19 = ssub.s32 %s13, 2
    %s20 = sadd.s32 %s13, 1
    %s21 = ssub.s32 %s13, %s20
    %p22 = scmp.eq.s32.totalorder %s21, 0
    %s24 = sadd.s32 %s23, 1
    %s25 = scalar_select %p22, %s23, %s24
    %p28 = pneg %p22
    %p29 = scmp.eq.s32.totalorder %s13, 1
    %p30 = por %p28, %p29
    %p31 = scmp.ne.s32.totalorder %s23, %s26
    %p32 = scmp.eq.s32.totalorder %s13, 0
    %p33 = por %p31, %p32
    %p34 = scmp.ne.s32.totalorder %s23, %s26
    %p35 = scmp.eq.s32.totalorder %s18, 1
    %p36 = por %p34, %p35
    %p37 = scmp.ne.s32.totalorder %s26, %s27
    %p38 = scmp.eq.s32.totalorder %s18, 0
    %p39 = por %p37, %p38
    %p40 = scmp.ne.s32.totalorder %s26, %s27
    %p41 = scmp.eq.s32.totalorder %s19, 1
    %p42 = por %p40, %p41
    %p44 = scmp.ne.s32.totalorder %s27, %s43
    %p45 = scmp.eq.s32.totalorder %s19, 0
    %p46 = por %p44, %p45
    %s47 = ssub.s32 %s13, %s20
    %p48 = scmp.eq.s32.totalorder %s47, 0
    %s50 = sadd.s32 %s49, 1
    %s51 = scalar_select %p48, %s49, %s50
    %p54 = pneg %p48
    %p55 = scmp.eq.s32.totalorder %s13, 1
    %p56 = por %p54, %p55
    %p57 = scmp.ne.s32.totalorder %s49, %s52
    %p58 = scmp.eq.s32.totalorder %s13, 0
    %p59 = por %p57, %p58
    %p60 = scmp.ne.s32.totalorder %s49, %s52
    %p61 = scmp.eq.s32.totalorder %s18, 1
    %p62 = por %p60, %p61
    %p63 = scmp.ne.s32.totalorder %s52, %s53
    %p64 = scmp.eq.s32.totalorder %s18, 0
    %p65 = por %p63, %p64
    %p66 = scmp.ne.s32.totalorder %s52, %s53
    %p67 = scmp.eq.s32.totalorder %s19, 1
    %p68 = por %p66, %p67
    %p70 = scmp.ne.s32.totalorder %s53, %s69
    %p71 = scmp.eq.s32.totalorder %s19, 0
    %p72 = por %p70, %p71
    %s74 = sadd.s32 %s73, 1
    %p77 = scmp.eq.s32.totalorder %s13, 1
    %p78 = scmp.ne.s32.totalorder %s73, %s75
    %p79 = scmp.eq.s32.totalorder %s13, 0
    %p80 = por %p78, %p79
    %p81 = scmp.ne.s32.totalorder %s73, %s75
    %p82 = scmp.eq.s32.totalorder %s18, 1
    %p83 = por %p81, %p82
    %p84 = scmp.ne.s32.totalorder %s75, %s76
    %p85 = scmp.eq.s32.totalorder %s18, 0
    %p86 = por %p84, %p85
    %p87 = scmp.ne.s32.totalorder %s75, %s76
    %p88 = scmp.eq.s32.totalorder %s19, 1
    %p89 = por %p87, %p88
    %p91 = scmp.ne.s32.totalorder %s76, %s90
    %p92 = scmp.eq.s32.totalorder %s19, 0
    %p93 = por %p91, %p92
    %s95 = sadd.s32 %s94, 1
    %p98 = scmp.eq.s32.totalorder %s13, 1
    %p99 = scmp.ne.s32.totalorder %s94, %s96
    %p100 = scmp.eq.s32.totalorder %s13, 0
    %p101 = por %p99, %p100
    %p102 = scmp.ne.s32.totalorder %s94, %s96
    %p103 = scmp.eq.s32.totalorder %s18, 1
    %p104 = por %p102, %p103
    %p105 = scmp.ne.s32.totalorder %s96, %s97
    %p106 = scmp.eq.s32.totalorder %s18, 0
    %p107 = por %p105, %p106
    %p108 = scmp.ne.s32.totalorder %s96, %s97
    %p109 = scmp.eq.s32.totalorder %s19, 1
    %p110 = por %p108, %p109
    %p112 = scmp.ne.s32.totalorder %s97, %s111
    %p113 = scmp.eq.s32.totalorder %s19, 0
    %p114 = por %p112, %p113
    %s116 = sadd.s32 %s115, 1
    %p119 = scmp.eq.s32.totalorder %s13, 1
    %p120 = scmp.ne.s32.totalorder %s115, %s117
    %p121 = scmp.eq.s32.totalorder %s13, 0
    %p122 = por %p120, %p121
    %p123 = scmp.ne.s32.totalorder %s115, %s117
    %p124 = scmp.eq.s32.totalorder %s18, 1
    %p125 = por %p123, %p124
    %p126 = scmp.ne.s32.totalorder %s117, %s118
    %p127 = scmp.eq.s32.totalorder %s18, 0
    %p128 = por %p126, %p127
    %p129 = scmp.ne.s32.totalorder %s117, %s118
    %p130 = scmp.eq.s32.totalorder %s19, 1
    %p131 = por %p129, %p130
    %p133 = scmp.ne.s32.totalorder %s118, %s132
    %p134 = scmp.eq.s32.totalorder %s19, 0
    %p135 = por %p133, %p134
    %s137 = sadd.s32 %s136, 1
    %p140 = scmp.eq.s32.totalorder %s13, 1
    %p141 = scmp.ne.s32.totalorder %s136, %s138
    %p142 = scmp.eq.s32.totalorder %s13, 0
    %p143 = por %p141, %p142
    %p144 = scmp.ne.s32.totalorder %s136, %s138
    %p145 = scmp.eq.s32.totalorder %s18, 1
    %p146 = por %p144, %p145
    %p147 = scmp.ne.s32.totalorder %s138, %s139
    %p148 = scmp.eq.s32.totalorder %s18, 0
    %p149 = por %p147, %p148
    %p150 = scmp.ne.s32.totalorder %s138, %s139
    %p151 = scmp.eq.s32.totalorder %s19, 1
    %p152 = por %p150, %p151
    %p154 = scmp.ne.s32.totalorder %s139, %s153
    %p155 = scmp.eq.s32.totalorder %s19, 0
    %p156 = por %p154, %p155
    %s158 = sadd.s32 %s157, 1
    %p161 = scmp.eq.s32.totalorder %s13, 1
    %p162 = scmp.ne.s32.totalorder %s157, %s159
    %p163 = scmp.eq.s32.totalorder %s13, 0
    %p164 = por %p162, %p163
    %p165 = scmp.ne.s32.totalorder %s157, %s159
    %p166 = scmp.eq.s32.totalorder %s18, 1
    %p167 = por %p165, %p166
    %p168 = scmp.ne.s32.totalorder %s159, %s160
    %p169 = scmp.eq.s32.totalorder %s18, 0
    %p170 = por %p168, %p169
    %p171 = scmp.ne.s32.totalorder %s159, %s160
    %p172 = scmp.eq.s32.totalorder %s19, 1
    %p173 = por %p171, %p172
    %p175 = scmp.ne.s32.totalorder %s160, %s174
    %p176 = scmp.eq.s32.totalorder %s19, 0
    %p177 = por %p175, %p176
    %s178 = ssub.s32 %s13, %s20
    %p179 = scmp.eq.s32.totalorder %s178, 0
    %s181 = sadd.s32 %s180, 1
    %s182 = scalar_select %p179, %s180, %s181
    %p185 = pneg %p179
    %p186 = scmp.eq.s32.totalorder %s13, 1
    %p187 = por %p185, %p186
    %p188 = scmp.ne.s32.totalorder %s180, %s183
    %p189 = scmp.eq.s32.totalorder %s13, 0
    %p190 = por %p188, %p189
    %p191 = scmp.ne.s32.totalorder %s180, %s183
    %p192 = scmp.eq.s32.totalorder %s18, 1
    %p193 = por %p191, %p192
    %p194 = scmp.ne.s32.totalorder %s183, %s184
    %p195 = scmp.eq.s32.totalorder %s18, 0
    %p196 = por %p194, %p195
    %p197 = scmp.ne.s32.totalorder %s183, %s184
    %p198 = scmp.eq.s32.totalorder %s19, 1
    %p199 = por %p197, %p198
    %p201 = scmp.ne.s32.totalorder %s184, %s200
    %p202 = scmp.eq.s32.totalorder %s19, 0
    %p203 = por %p201, %p202
    %p204 = scmp.le.s32.totalorder 1, %s13
    %p205 = scmp.lt.s32.totalorder %s13, 3
    %p206 = pnand %p204, %p205
    %p207 = pneg %p206
    // Predicated region
    $region9: #{_lambda_.2} parent=5 // pred_check
      _
    $region10: #{_lambda_.2} parent=5 // pred_check_branch
      %209 = sbr.rel (%p206) target = $region12
    $region11: #{_lambda_.2} parent=5 // pred_region
      %s210 = ssub.s32 %s13, 1
      // Predicated region
      $region13: #{_lambda_.2} parent=11 // pred_check
        %p211 = pneg %p86
      $region14: #{_lambda_.2} parent=11 // pred_check_branch
        %213 = sbr.rel (%p211) target = $region16
      $region15: #{_lambda_.2} parent=11 // pred_region
        _
      $region16: #{_lambda_.2} parent=11 // pred_fallthru
        _
      // Predicated region
      $region17: #{_lambda_.2} parent=11 // pred_check
        %p214 = pneg %p107
      $region18: #{_lambda_.2} parent=11 // pred_check_branch
        %216 = sbr.rel (%p214) target = $region20
      $region19: #{_lambda_.2} parent=11 // pred_region
        _
      $region20: #{_lambda_.2} parent=11 // pred_fallthru
        _
      // Predicated region
      $region21: #{_lambda_.2} parent=11 // pred_check
        %p217 = pneg %p128
      $region22: #{_lambda_.2} parent=11 // pred_check_branch
        %219 = sbr.rel (%p217) target = $region24
      $region23: #{_lambda_.2} parent=11 // pred_region
        _
      $region24: #{_lambda_.2} parent=11 // pred_fallthru
        _
      // Predicated region
      $region25: #{_lambda_.2} parent=11 // pred_check
        %p220 = pneg %p149
      $region26: #{_lambda_.2} parent=11 // pred_check_branch
        %222 = sbr.rel (%p220) target = $region28
      $region27: #{_lambda_.2} parent=11 // pred_region
        _
      $region28: #{_lambda_.2} parent=11 // pred_fallthru
        _
      // Predicated region
      $region29: #{_lambda_.2} parent=11 // pred_check
        %p223 = pneg %p170
      $region30: #{_lambda_.2} parent=11 // pred_check_branch
        %225 = sbr.rel (%p223) target = $region32
      $region31: #{_lambda_.2} parent=11 // pred_region
        _
      $region32: #{_lambda_.2} parent=11 // pred_fallthru
        _
    $region12: #{_lambda_.2} parent=5 // pred_fallthru
      _
    %p226 = scmp.lt.s32.totalorder %s13, 2
    // Predicated region
    $region33: #{_lambda_.2} parent=5 // pred_check
      %p227 = pneg %p226
    $region34: #{_lambda_.2} parent=5 // pred_check_branch
      %229 = sbr.rel (%p227) target = $region36
    $region35: #{_lambda_.2} parent=5 // pred_region
      // Predicated region
      $region37: #{_lambda_.2} parent=35 // pred_check
        %p230 = pneg %p33
      $region38: #{_lambda_.2} parent=35 // pred_check_branch
        %232 = sbr.rel (%p230) target = $region40
      $region39: #{_lambda_.2} parent=35 // pred_region
        %p233 = scmp.lt.s32.totalorder %s13, 1
        %s234 = scalar_select %p233, %s13, 1
        %s235 = smul.addr %s234, 18
        %s236 = smul.addr %s235, 8
        %s237 = scalar_lea.vmem %s0, %s236
      $region40: #{_lambda_.2} parent=35 // pred_fallthru
        _
      // Predicated region
      $region41: #{_lambda_.2} parent=35 // pred_check
        %p238 = pneg %p59
      $region42: #{_lambda_.2} parent=35 // pred_check_branch
        %240 = sbr.rel (%p238) target = $region44
      $region43: #{_lambda_.2} parent=35 // pred_region
        %p241 = scmp.lt.s32.totalorder %s13, 1
        %s242 = scalar_select %p241, %s13, 1
        %s243 = smul.addr %s242, 8
        %s244 = smul.addr %s243, 8
        %s245 = scalar_lea.vmem %s1, %s244
      $region44: #{_lambda_.2} parent=35 // pred_fallthru
        _
    $region36: #{_lambda_.2} parent=5 // pred_fallthru
      _
    %p246 = scmp.le.s32.totalorder 1, %s13
    %p247 = scmp.lt.s32.totalorder %s13, 3
    %p248 = pnand %p246, %p247
    %p249 = pneg %p248
    // Predicated region
    $region45: #{_lambda_.2} parent=5 // pred_check
      _
    $region46: #{_lambda_.2} parent=5 // pred_check_branch
      %251 = sbr.rel (%p248) target = $region48
    $region47: #{_lambda_.2} parent=5 // pred_region
      %s252 = ssub.s32 %s13, 1
      %p253 = scmp.lt.s32.totalorder %s18, 1
      %s254 = scalar_select %p253, %s18, 1
      %s255 = smul.addr %s254, 18
      %s256 = smul.addr %s255, 8
      %s257 = scalar_lea.vmem %s0, %s256
      %p258 = pneg %p39
      %p259 = pneg %p36
      %p260 = scmp.lt.s32.totalorder %s18, 1
      %s261 = scalar_select %p260, %s18, 1
      %s262 = smul.addr %s261, 8
      %s263 = smul.addr %s262, 8
      %s264 = scalar_lea.vmem %s1, %s263
      %p265 = pneg %p65
      %p266 = pneg %p62
      %p267 = pneg %p86
      %p268 = pneg %p83
      %p269 = pneg %p107
      %p270 = pneg %p104
      %p271 = pneg %p128
      %p272 = pneg %p125
      %p273 = pneg %p149
      %p274 = pneg %p146
      %p275 = pneg %p170
      %p276 = pneg %p167
      %p277 = pneg %p196
      %p278 = pneg %p193
      %p279 = scmp.lt.s32.totalorder %s18, 1
      %s280 = scalar_select %p279, %s18, 1
      %s281 = smul.addr %s280, 8
      %s282 = smul.addr %s281, 8
      %s283 = scalar_lea.vmem %s7, %s282
      %p284 = scmp.lt.s32.totalorder %s18, 1
      %s285 = scalar_select %p284, %s18, 1
      %s286 = smul.addr %s285, 18
      %s287 = smul.addr %s286, 8
      %s288 = scalar_lea.vmem %s0, %s287
      %p289 = scmp.lt.s32.totalorder %s18, 1
      %s290 = scalar_select %p289, %s18, 1
      %s291 = smul.addr %s290, 8
      %s292 = smul.addr %s291, 8
      %s293 = scalar_lea.vmem %s1, %s292
      %p294 = scmp.lt.s32.totalorder %s18, 1
      %s295 = scalar_select %p294, %s18, 1
      %s296 = smul.addr %s295, 8
      %s297 = smul.addr %s296, 8
      %s298 = scalar_lea.vmem %s7, %s297
      %v300 = vld [vmem:[%s288] sm:$0xff]
      %v301 = vld [vmem:[%s288 + $0x8] sm:$0x1]
      %v302 = vld [vmem:[%s288 + $0x10] sm:$0xff]
      %v303 = vld [vmem:[%s288 + $0x18] sm:$0x1]
      %v304 = vld [vmem:[%s288 + $0x20] sm:$0xff]
      %v305 = vld [vmem:[%s288 + $0x28] sm:$0x1]
      %v306 = vld [vmem:[%s288 + $0x30] sm:$0xff]
      %v307 = vld [vmem:[%s288 + $0x38] sm:$0x1]
      %v308 = vld [vmem:[%s288 + $0x40] sm:$0xff]
      %v309 = vld [vmem:[%s288 + $0x48] sm:$0x1]
      %v310 = vld [vmem:[%s288 + $0x50] sm:$0xff]
      %v311 = vld [vmem:[%s288 + $0x58] sm:$0x1]
      %v312 = vld [vmem:[%s288 + $0x60] sm:$0xff]
      %v313 = vld [vmem:[%s288 + $0x68] sm:$0x1]
      %v314 = vld [vmem:[%s288 + $0x70] sm:$0xff]
      %v315 = vld [vmem:[%s288 + $0x78] sm:$0x1]
      %v316 = vld [vmem:[%s288 + $0x80] sm:$0xff]
      %v317 = vld [vmem:[%s288 + $0x88] sm:$0x1]
      %vm334 = vcmask 1046528
      %v335 = vrot.slane %v300, 1
      %v336 = vrot.slane %v301, 1
      %v337 = vsel %vm334, %v335, %v336
      %v338 = vrot.slane %v302, 1
      %v339 = vrot.slane %v303, 1
      %v340 = vsel %vm334, %v338, %v339
      %v341 = vrot.slane %v304, 1
      %v342 = vrot.slane %v305, 1
      %v343 = vsel %vm334, %v341, %v342
      %v344 = vrot.slane %v306, 1
      %v345 = vrot.slane %v307, 1
      %v346 = vsel %vm334, %v344, %v345
      %v347 = vrot.slane %v308, 1
      %v348 = vrot.slane %v309, 1
      %v349 = vsel %vm334, %v347, %v348
      %v350 = vrot.slane %v310, 1
      %v351 = vrot.slane %v311, 1
      %v352 = vsel %vm334, %v350, %v351
      %v353 = vrot.slane %v312, 1
      %v354 = vrot.slane %v313, 1
      %v355 = vsel %vm334, %v353, %v354
      %v356 = vrot.slane %v314, 1
      %v357 = vrot.slane %v315, 1
      %v358 = vsel %vm334, %v356, %v357
      %v361 = vrot.slane %v316, 1
      %v362 = vrot.slane %v317, 1
      %v363 = vsel %vm334, %v361, %v362
      %364 = vrot.lane.b32.xlu0 %v337, 16
      %v365 = vpop.permute.xlu0 %364
      %366 = vrot.lane.b32.xlu0 %v340, 16
      %v367 = vpop.permute.xlu0 %366
      %368 = vrot.lane.b32.xlu0 %v343, 16
      %v369 = vpop.permute.xlu0 %368
      %370 = vrot.lane.b32.xlu0 %v346, 16
      %v371 = vpop.permute.xlu0 %370
      %372 = vrot.lane.b32.xlu0 %v349, 16
      %v373 = vpop.permute.xlu0 %372
      %374 = vrot.lane.b32.xlu0 %v352, 16
      %v375 = vpop.permute.xlu0 %374
      %376 = vrot.lane.b32.xlu0 %v355, 16
      %v377 = vpop.permute.xlu0 %376
      %378 = vrot.lane.b32.xlu0 %v358, 16
      %v379 = vpop.permute.xlu0 %378
      %388 = vrot.lane.b32.xlu0 %v302, 32
      %v389 = vpop.permute.xlu0 %388
      %390 = vrot.lane.b32.xlu0 %v304, 32
      %v391 = vpop.permute.xlu0 %390
      %392 = vrot.lane.b32.xlu0 %v306, 32
      %v393 = vpop.permute.xlu0 %392
      %394 = vrot.lane.b32.xlu0 %v308, 32
      %v395 = vpop.permute.xlu0 %394
      %396 = vrot.lane.b32.xlu0 %v310, 32
      %v397 = vpop.permute.xlu0 %396
      %398 = vrot.lane.b32.xlu0 %v312, 32
      %v399 = vpop.permute.xlu0 %398
      %400 = vrot.lane.b32.xlu0 %v314, 32
      %v401 = vpop.permute.xlu0 %400
      %402 = vrot.lane.b32.xlu0 %v316, 32
      %v403 = vpop.permute.xlu0 %402
      %412 = vrot.lane.b32.xlu0 %v340, 48
      %v413 = vpop.permute.xlu0 %412
      %414 = vrot.lane.b32.xlu0 %v343, 48
      %v415 = vpop.permute.xlu0 %414
      %416 = vrot.lane.b32.xlu0 %v346, 48
      %v417 = vpop.permute.xlu0 %416
      %418 = vrot.lane.b32.xlu0 %v349, 48
      %v419 = vpop.permute.xlu0 %418
      %420 = vrot.lane.b32.xlu0 %v352, 48
      %v421 = vpop.permute.xlu0 %420
      %422 = vrot.lane.b32.xlu0 %v355, 48
      %v423 = vpop.permute.xlu0 %422
      %424 = vrot.lane.b32.xlu0 %v358, 48
      %v425 = vpop.permute.xlu0 %424
      %426 = vrot.lane.b32.xlu0 %v363, 48
      %v427 = vpop.permute.xlu0 %426
      %vm436 = vcmask 130048
      %v437 = vsel %vm436, %v300, %v365
      %v438 = vsel %vm436, %v302, %v367
      %v439 = vsel %vm436, %v304, %v369
      %v440 = vsel %vm436, %v306, %v371
      %v441 = vsel %vm436, %v308, %v373
      %v442 = vsel %vm436, %v310, %v375
      %v443 = vsel %vm436, %v312, %v377
      %v444 = vsel %vm436, %v314, %v379
      %vm445 = vcmask 261120
      %v446 = vsel %vm445, %v437, %v389
      %v447 = vsel %vm445, %v438, %v391
      %v448 = vsel %vm445, %v439, %v393
      %v449 = vsel %vm445, %v440, %v395
      %v450 = vsel %vm445, %v441, %v397
      %v451 = vsel %vm445, %v442, %v399
      %v452 = vsel %vm445, %v443, %v401
      %v453 = vsel %vm445, %v444, %v403
      %vm454 = vcmask 392192
      %v455 = vsel %vm454, %v446, %v413
      %v456 = vsel %vm454, %v447, %v415
      %v457 = vsel %vm454, %v448, %v417
      %v458 = vsel %vm454, %v449, %v419
      %v459 = vsel %vm454, %v450, %v421
      %v460 = vsel %vm454, %v451, %v423
      %v461 = vsel %vm454, %v452, %v425
      %v462 = vsel %vm454, %v453, %v427
      %v463 = vpack.c.bf16 %v456, %v455
      %v464 = vpack.c.bf16 %v458, %v457
      %v465 = vpack.c.bf16 %v460, %v459
      %v466 = vpack.c.bf16 %v462, %v461
      %v467 = vld [vmem:[%s2] sm:$0xf]
      %v468 = vld [vmem:[%s2 + $0x4] sm:$0xf]
      %v469 = vld [vmem:[%s2 + $0x8] sm:$0xf]
      %v470 = vld [vmem:[%s2 + $0xc] sm:$0xf]
      %v471 = vld [vmem:[%s2 + $0x10] sm:$0xf]
      %v472 = vld [vmem:[%s2 + $0x14] sm:$0xf]
      %v473 = vld [vmem:[%s2 + $0x18] sm:$0xf]
      %v474 = vld [vmem:[%s2 + $0x1c] sm:$0xf]
      %v483 = vunpack.c.l.b16 %v467
      %v484 = vunpack.c.l.b16 %v468
      %v485 = vunpack.c.l.b16 %v469
      %v486 = vunpack.c.l.b16 %v470
      %v487 = vunpack.c.l.b16 %v471
      %v488 = vunpack.c.l.b16 %v472
      %v489 = vunpack.c.l.b16 %v473
      %v490 = vunpack.c.l.b16 %v474
      %v491 = vpack.c.b16 %v484, %v483
      %v492 = vpack.c.b16 %v486, %v485
      %v493 = vpack.c.b16 %v488, %v487
      %v494 = vpack.c.b16 %v490, %v489
      %vm499 = vcmask 523264
      %v501 = vsel %vm499, %v463, 0
      %v504 = vsel %vm499, %v464, 0
      %v507 = vsel %vm499, %v465, 0
      %v510 = vsel %vm499, %v466, 0
      %512 = vmatprep.subr.bf16.mxu0 0
      %513 = vmatpush1.bf16.msra.mxu0 %v491
      %514 = vmatprep.subr.bf16.mxu0 0
      %515 = vmatpush1.bf16.msra.mxu0 %v492
      %516 = vmatprep.subr.bf16.mxu0 0
      %517 = vmatpush1.bf16.msra.mxu0 %v493
      %518 = vmatprep.subr.bf16.mxu0 0
      %519 = vmatpush1.bf16.msra.mxu0 %v494
      %520 = vmatprep.subr.bf16.mxu0 0
      %521 = vmatpush1.bf16.msra.mxu0 0
      %522 = vmatprep.subr.bf16.mxu0 0
      %523 = vmatpush1.bf16.msra.mxu0 0
      %524 = vmatprep.subr.bf16.mxu0 0
      %525 = vmatpush1.bf16.msra.mxu0 0
      %526 = vmatprep.subr.bf16.mxu0 0
      %527 = vmatpush1.bf16.msra.mxu0 0
      %528 = vmatprep.subr.bf16.mxu0 0
      %529 = vmatpush1.bf16.msra.mxu0 0
      %530 = vmatprep.subr.bf16.mxu0 0
      %531 = vmatpush1.bf16.msra.mxu0 0
      %532 = vmatprep.subr.bf16.mxu0 0
      %533 = vmatpush1.bf16.msra.mxu0 0
      %534 = vmatprep.subr.bf16.mxu0 0
      %535 = vmatpush1.bf16.msra.mxu0 0
      %536 = vmatprep.subr.bf16.mxu0 0
      %537 = vmatpush1.bf16.msra.mxu0 0
      %538 = vmatprep.subr.bf16.mxu0 0
      %539 = vmatpush1.bf16.msra.mxu0 0
      %540 = vmatprep.subr.bf16.mxu0 0
      %541 = vmatpush1.bf16.msra.mxu0 0
      %542 = vmatprep.subr.bf16.mxu0 0
      %543 = vmatpush1.bf16.msra.mxu0 0
      %544 = vmatprep.mubr.bf16.mxu0 0
      %545 = vmatmul.mubr.bf16.gmra.mrb[0].mxu0 %v501
      %v546 = vpop.f32.mrb[0].mxu0
      %v547 = vadd.f32 0.0, %v546
      %v548 = vpop.f32.mrb[0].mxu0
      %v549 = vpop.f32.mrb[0].mxu0
      %v550 = vadd.f32 0.0, %v549
      %v551 = vpop.f32.mrb[0].mxu0
      %552 = vmatprep.mubr.bf16.mxu0 0
      %553 = vmatmul.mubr.bf16.gmra.mrb[0].mxu0 %v504
      %v554 = vpop.f32.mrb[0].mxu0
      %v555 = vadd.f32 0.0, %v554
      %v556 = vpop.f32.mrb[0].mxu0
      %v557 = vpop.f32.mrb[0].mxu0
      %v558 = vadd.f32 0.0, %v557
      %v559 = vpop.f32.mrb[0].mxu0
      %560 = vmatprep.mubr.bf16.mxu0 0
      %561 = vmatmul.mubr.bf16.gmra.mrb[0].mxu0 %v507
      %v562 = vpop.f32.mrb[0].mxu0
      %v563 = vadd.f32 0.0, %v562
      %v564 = vpop.f32.mrb[0].mxu0
      %v565 = vpop.f32.mrb[0].mxu0
      %v566 = vadd.f32 0.0, %v565
      %v567 = vpop.f32.mrb[0].mxu0
      %568 = vmatprep.mubr.bf16.mxu0 0
      %569 = vmatmul.mubr.bf16.gmra.mrb[0].mxu0 %v510
      %v570 = vpop.f32.mrb[0].mxu0
      %v571 = vadd.f32 0.0, %v570
      %v572 = vpop.f32.mrb[0].mxu0
      %v573 = vpop.f32.mrb[0].mxu0
      %v574 = vadd.f32 0.0, %v573
      %v575 = vpop.f32.mrb[0].mxu0
      %576 = vdwg.mxu0
      %v577 = vld [vmem:[%s293] sm:$0xff]
      %v578 = vld [vmem:[%s293 + $0x8] sm:$0xff]
      %v579 = vld [vmem:[%s293 + $0x10] sm:$0xff]
      %v580 = vld [vmem:[%s293 + $0x18] sm:$0xff]
      %v581 = vld [vmem:[%s293 + $0x20] sm:$0xff]
      %v582 = vld [vmem:[%s293 + $0x28] sm:$0xff]
      %v583 = vld [vmem:[%s293 + $0x30] sm:$0xff]
      %v584 = vld [vmem:[%s293 + $0x38] sm:$0xff]
      %v585 = vpack.c.bf16 %v578, %v577
      %v586 = vpack.c.bf16 %v580, %v579
      %v587 = vpack.c.bf16 %v582, %v581
      %v588 = vpack.c.bf16 %v584, %v583
      %v589 = vld [vmem:[%s6] sm:$0x3]
      %vm590 = vcmask 31744
      %v592 = vsel %vm590, %v585, 0
      %v595 = vsel %vm590, %v586, 0
      %v598 = vsel %vm590, %v587, 0
      %v601 = vsel %vm590, %v588, 0
      %vm603 = vcmask 1041408
      %v605 = vsel %vm603, %v589, 0
      %607 = vmatprep.subr.bf16.mxu0 0
      %608 = vmatpush1.bf16.msra.mxu0 %v605
      %609 = vmatprep.subr.bf16.mxu0 0
      %610 = vmatpush1.bf16.msra.mxu0 0
      %611 = vmatprep.subr.bf16.mxu0 0
      %612 = vmatpush1.bf16.msra.mxu0 0
      %613 = vmatprep.subr.bf16.mxu0 0
      %614 = vmatpush1.bf16.msra.mxu0 0
      %615 = vmatprep.subr.bf16.mxu0 0
      %616 = vmatpush1.bf16.msra.mxu0 0
      %617 = vmatprep.subr.bf16.mxu0 0
      %618 = vmatpush1.bf16.msra.mxu0 0
      %619 = vmatprep.subr.bf16.mxu0 0
      %620 = vmatpush1.bf16.msra.mxu0 0
      %621 = vmatprep.subr.bf16.mxu0 0
      %622 = vmatpush1.bf16.msra.mxu0 0
      %623 = vmatprep.subr.bf16.mxu0 0
      %624 = vmatpush1.bf16.msra.mxu0 0
      %625 = vmatprep.subr.bf16.mxu0 0
      %626 = vmatpush1.bf16.msra.mxu0 0
      %627 = vmatprep.subr.bf16.mxu0 0
      %628 = vmatpush1.bf16.msra.mxu0 0
      %629 = vmatprep.subr.bf16.mxu0 0
      %630 = vmatpush1.bf16.msra.mxu0 0
      %631 = vmatprep.subr.bf16.mxu0 0
      %632 = vmatpush1.bf16.msra.mxu0 0
      %633 = vmatprep.subr.bf16.mxu0 0
      %634 = vmatpush1.bf16.msra.mxu0 0
      %635 = vmatprep.subr.bf16.mxu0 0
      %636 = vmatpush1.bf16.msra.mxu0 0
      %637 = vmatprep.subr.bf16.mxu0 0
      %638 = vmatpush1.bf16.msra.mxu0 0
      %639 = vmatprep.mubr.bf16.mxu0 0
      %640 = vmatmul.mubr.bf16.gmra.mrb[0].mxu0 %v592
      %v641 = vpop.f32.mrb[0].mxu0
      %v642 = vadd.f32 0.0, %v641
      %v643 = vpop.f32.mrb[0].mxu0
      %v644 = vpop.f32.mrb[0].mxu0
      %v645 = vadd.f32 0.0, %v644
      %v646 = vpop.f32.mrb[0].mxu0
      %647 = vmatprep.mubr.bf16.mxu0 0
      %648 = vmatmul.mubr.bf16.gmra.mrb[0].mxu0 %v595
      %v649 = vpop.f32.mrb[0].mxu0
      %v650 = vadd.f32 0.0, %v649
      %v651 = vpop.f32.mrb[0].mxu0
      %v652 = vpop.f32.mrb[0].mxu0
      %v653 = vadd.f32 0.0, %v652
      %v654 = vpop.f32.mrb[0].mxu0
      %655 = vmatprep.mubr.bf16.mxu0 0
      %656 = vmatmul.mubr.bf16.gmra.mrb[0].mxu0 %v598
      %v657 = vpop.f32.mrb[0].mxu0
      %v658 = vadd.f32 0.0, %v657
      %v659 = vpop.f32.mrb[0].mxu0
      %v660 = vpop.f32.mrb[0].mxu0
      %v661 = vadd.f32 0.0, %v660
      %v662 = vpop.f32.mrb[0].mxu0
      %663 = vmatprep.mubr.bf16.mxu0 0
      %664 = vmatmul.mubr.bf16.gmra.mrb[0].mxu0 %v601
      %v665 = vpop.f32.mrb[0].mxu0
      %v666 = vadd.f32 0.0, %v665
      %v667 = vpop.f32.mrb[0].mxu0
      %v668 = vpop.f32.mrb[0].mxu0
      %v669 = vadd.f32 0.0, %v668
      %v670 = vpop.f32.mrb[0].mxu0
      %671 = vdwg.mxu0
      %v672 = vld [vmem:[%s3] sm:$0x1]
      %v673 = vld [vmem:[%s4] sm:$0x1]
      %v675 = vlaneseq
      %v676 = vshrl.u32 %v675, 7
      %v677 = vsub.s32 0, %v676
      %v678 = vrot.slane %v672, %v677
      %v680 = vmul.f32 %v547, %v678
      %v681 = vmul.f32 %v550, %v678
      %v682 = vmul.f32 %v555, %v678
      %v683 = vmul.f32 %v558, %v678
      %v684 = vmul.f32 %v563, %v678
      %v685 = vmul.f32 %v566, %v678
      %v686 = vmul.f32 %v571, %v678
      %v687 = vmul.f32 %v574, %v678
      %v689 = vlaneseq
      %v690 = vshrl.u32 %v689, 7
      %v691 = vsub.s32 0, %v690
      %v692 = vrot.slane %v673, %v691
      %v694 = vadd.f32 %v680, %v692
      %v695 = vadd.f32 %v681, %v692
      %v696 = vadd.f32 %v682, %v692
      %v697 = vadd.f32 %v683, %v692
      %v698 = vadd.f32 %v684, %v692
      %v699 = vadd.f32 %v685, %v692
      %v700 = vadd.f32 %v686, %v692
      %v701 = vadd.f32 %v687, %v692
      %v702 = vmax.f32 %v694, 0.0
      %v703 = vmax.f32 %v695, 0.0
      %v704 = vmax.f32 %v696, 0.0
      %v705 = vmax.f32 %v697, 0.0
      %v706 = vmax.f32 %v698, 0.0
      %v707 = vmax.f32 %v699, 0.0
      %v708 = vmax.f32 %v700, 0.0
      %v709 = vmax.f32 %v701, 0.0
      %vm710 = vcmask 64512
      %711 = vst.msk [vmem:[#allocation2] sm:$0xff] %vm710, 0.0
      %vm712 = vcmask 58368
      %713 = vst.msk [vmem:[#allocation2 + $0x8] sm:$0x3] %vm712, 0.0
      %714 = vst.msk [vmem:[#allocation2 + $0x10] sm:$0xff] %vm710, 0.0
      %715 = vst.msk [vmem:[#allocation2 + $0x18] sm:$0x3] %vm712, 0.0
      %716 = vst.msk [vmem:[#allocation2 + $0x20] sm:$0xff] %vm710, 0.0
      %717 = vst.msk [vmem:[#allocation2 + $0x28] sm:$0x3] %vm712, 0.0
      %718 = vst.msk [vmem:[#allocation2 + $0x30] sm:$0xff] %vm710, 0.0
      %719 = vst.msk [vmem:[#allocation2 + $0x38] sm:$0x3] %vm712, 0.0
      %720 = vst.msk [vmem:[#allocation2 + $0x40] sm:$0xff] %vm710, 0.0
      %721 = vst.msk [vmem:[#allocation2 + $0x48] sm:$0x3] %vm712, 0.0
      %722 = vst.msk [vmem:[#allocation2 + $0x50] sm:$0xff] %vm710, 0.0
      %723 = vst.msk [vmem:[#allocation2 + $0x58] sm:$0x3] %vm712, 0.0
      %724 = vst.msk [vmem:[#allocation2 + $0x60] sm:$0xff] %vm710, 0.0
      %725 = vst.msk [vmem:[#allocation2 + $0x68] sm:$0x3] %vm712, 0.0
      %726 = vst.msk [vmem:[#allocation2 + $0x70] sm:$0xff] %vm710, 0.0
      %727 = vst.msk [vmem:[#allocation2 + $0x78] sm:$0x3] %vm712, 0.0
      %728 = vst.msk [vmem:[#allocation2 + $0x80] sm:$0xff] %vm710, 0.0
      %729 = vst.msk [vmem:[#allocation2 + $0x88] sm:$0x3] %vm712, 0.0
      %730 = vst.msk [vmem:[#allocation2 + $0x90] sm:$0xff] %vm710, 0.0
      %731 = vst.msk [vmem:[#allocation2 + $0x98] sm:$0x3] %vm712, 0.0
      %s732 = scalar_lea.vmem [#allocation2], 16
      %733 = vst.msk [vmem:[%s732 + $0x1] sm:$0xff] %vm710, %v702
      %734 = vst.msk [vmem:[%s732 + $0x11] sm:$0xff] %vm710, %v703
      %735 = vst.msk [vmem:[%s732 + $0x21] sm:$0xff] %vm710, %v704
      %736 = vst.msk [vmem:[%s732 + $0x31] sm:$0xff] %vm710, %v705
      %737 = vst.msk [vmem:[%s732 + $0x41] sm:$0xff] %vm710, %v706
      %738 = vst.msk [vmem:[%s732 + $0x51] sm:$0xff] %vm710, %v707
      %739 = vst.msk [vmem:[%s732 + $0x61] sm:$0xff] %vm710, %v708
      %740 = vst.msk [vmem:[%s732 + $0x71] sm:$0xff] %vm710, %v709
      %v741 = vld [vmem:[#allocation2] sm:$0xff]
      %v742 = vld [vmem:[#allocation2 + $0x10] sm:$0xff]
      %v743 = vld [vmem:[#allocation2 + $0x20] sm:$0xff]
      %v744 = vld [vmem:[#allocation2 + $0x30] sm:$0xff]
      %v745 = vld [vmem:[#allocation2 + $0x40] sm:$0xff]
      %v746 = vld [vmem:[#allocation2 + $0x50] sm:$0xff]
      %v747 = vld [vmem:[#allocation2 + $0x60] sm:$0xff]
      %v748 = vld [vmem:[#allocation2 + $0x70] sm:$0xff]
      %v749 = vld [vmem:[#allocation2 + $0x1] sm:$0xff]
      %v750 = vld [vmem:[#allocation2 + $0x11] sm:$0xff]
      %v751 = vld [vmem:[#allocation2 + $0x21] sm:$0xff]
      %v752 = vld [vmem:[#allocation2 + $0x31] sm:$0xff]
      %v753 = vld [vmem:[#allocation2 + $0x41] sm:$0xff]
      %v754 = vld [vmem:[#allocation2 + $0x51] sm:$0xff]
      %v755 = vld [vmem:[#allocation2 + $0x61] sm:$0xff]
      %v756 = vld [vmem:[#allocation2 + $0x71] sm:$0xff]
      %v757 = vld [vmem:[#allocation2 + $0x2] sm:$0xff]
      %v758 = vld [vmem:[#allocation2 + $0x12] sm:$0xff]
      %v759 = vld [vmem:[#allocation2 + $0x22] sm:$0xff]
      %v760 = vld [vmem:[#allocation2 + $0x32] sm:$0xff]
      %v761 = vld [vmem:[#allocation2 + $0x42] sm:$0xff]
      %v762 = vld [vmem:[#allocation2 + $0x52] sm:$0xff]
      %v763 = vld [vmem:[#allocation2 + $0x62] sm:$0xff]
      %v764 = vld [vmem:[#allocation2 + $0x72] sm:$0xff]
      %v765 = vld [vmem:[%s732] sm:$0xff]
      %v766 = vld [vmem:[%s732 + $0x10] sm:$0xff]
      %v767 = vld [vmem:[%s732 + $0x20] sm:$0xff]
      %v768 = vld [vmem:[%s732 + $0x30] sm:$0xff]
      %v769 = vld [vmem:[%s732 + $0x40] sm:$0xff]
      %v770 = vld [vmem:[%s732 + $0x50] sm:$0xff]
      %v771 = vld [vmem:[%s732 + $0x60] sm:$0xff]
      %v772 = vld [vmem:[%s732 + $0x70] sm:$0xff]
      %v773 = vld [vmem:[%s732 + $0x1] sm:$0xff]
      %v774 = vld [vmem:[%s732 + $0x11] sm:$0xff]
      %v775 = vld [vmem:[%s732 + $0x21] sm:$0xff]
      %v776 = vld [vmem:[%s732 + $0x31] sm:$0xff]
      %v777 = vld [vmem:[%s732 + $0x41] sm:$0xff]
      %v778 = vld [vmem:[%s732 + $0x51] sm:$0xff]
      %v779 = vld [vmem:[%s732 + $0x61] sm:$0xff]
      %v780 = vld [vmem:[%s732 + $0x71] sm:$0xff]
      %v781 = vld [vmem:[%s732 + $0x2] sm:$0xff]
      %v782 = vld [vmem:[%s732 + $0x12] sm:$0xff]
      %v783 = vld [vmem:[%s732 + $0x22] sm:$0xff]
      %v784 = vld [vmem:[%s732 + $0x32] sm:$0xff]
      %v785 = vld [vmem:[%s732 + $0x42] sm:$0xff]
      %v786 = vld [vmem:[%s732 + $0x52] sm:$0xff]
      %v787 = vld [vmem:[%s732 + $0x62] sm:$0xff]
      %v788 = vld [vmem:[%s732 + $0x72] sm:$0xff]
      %s789 = scalar_lea.vmem [#allocation2], 32
      %v790 = vld [vmem:[%s789] sm:$0xff]
      %v791 = vld [vmem:[%s789 + $0x10] sm:$0xff]
      %v792 = vld [vmem:[%s789 + $0x20] sm:$0xff]
      %v793 = vld [vmem:[%s789 + $0x30] sm:$0xff]
      %v794 = vld [vmem:[%s789 + $0x40] sm:$0xff]
      %v795 = vld [vmem:[%s789 + $0x50] sm:$0xff]
      %v796 = vld [vmem:[%s789 + $0x60] sm:$0xff]
      %v797 = vld [vmem:[%s789 + $0x70] sm:$0xff]
      %v798 = vld [vmem:[%s789 + $0x1] sm:$0xff]
      %v799 = vld [vmem:[%s789 + $0x11] sm:$0xff]
      %v800 = vld [vmem:[%s789 + $0x21] sm:$0xff]
      %v801 = vld [vmem:[%s789 + $0x31] sm:$0xff]
      %v802 = vld [vmem:[%s789 + $0x41] sm:$0xff]
      %v803 = vld [vmem:[%s789 + $0x51] sm:$0xff]
      %v804 = vld [vmem:[%s789 + $0x61] sm:$0xff]
      %v805 = vld [vmem:[%s789 + $0x71] sm:$0xff]
      %v806 = vld [vmem:[%s789 + $0x2] sm:$0xff]
      %v807 = vld [vmem:[%s789 + $0x12] sm:$0xff]
      %v808 = vld [vmem:[%s789 + $0x22] sm:$0xff]
      %v809 = vld [vmem:[%s789 + $0x32] sm:$0xff]
      %v810 = vld [vmem:[%s789 + $0x42] sm:$0xff]
      %v811 = vld [vmem:[%s789 + $0x52] sm:$0xff]
      %v812 = vld [vmem:[%s789 + $0x62] sm:$0xff]
      %v813 = vld [vmem:[%s789 + $0x72] sm:$0xff]
      %822 = vrot.lane.b32.xlu0 %v749, 8
      %v823 = vpop.permute.xlu0 %822
      %824 = vrot.lane.b32.xlu0 %v750, 8
      %v825 = vpop.permute.xlu0 %824
      %826 = vrot.lane.b32.xlu0 %v751, 8
      %v827 = vpop.permute.xlu0 %826
      %828 = vrot.lane.b32.xlu0 %v752, 8
      %v829 = vpop.permute.xlu0 %828
      %830 = vrot.lane.b32.xlu0 %v753, 8
      %v831 = vpop.permute.xlu0 %830
      %832 = vrot.lane.b32.xlu0 %v754, 8
      %v833 = vpop.permute.xlu0 %832
      %834 = vrot.lane.b32.xlu0 %v755, 8
      %v835 = vpop.permute.xlu0 %834
      %836 = vrot.lane.b32.xlu0 %v756, 8
      %v837 = vpop.permute.xlu0 %836
      %854 = vrot.lane.b32.xlu0 %v757, 16
      %v855 = vpop.permute.xlu0 %854
      %856 = vrot.lane.b32.xlu0 %v758, 16
      %v857 = vpop.permute.xlu0 %856
      %858 = vrot.lane.b32.xlu0 %v759, 16
      %v859 = vpop.permute.xlu0 %858
      %860 = vrot.lane.b32.xlu0 %v760, 16
      %v861 = vpop.permute.xlu0 %860
      %862 = vrot.lane.b32.xlu0 %v761, 16
      %v863 = vpop.permute.xlu0 %862
      %864 = vrot.lane.b32.xlu0 %v762, 16
      %v865 = vpop.permute.xlu0 %864
      %866 = vrot.lane.b32.xlu0 %v763, 16
      %v867 = vpop.permute.xlu0 %866
      %868 = vrot.lane.b32.xlu0 %v764, 16
      %v869 = vpop.permute.xlu0 %868
      %886 = vrot.lane.b32.xlu0 %v765, 24
      %v887 = vpop.permute.xlu0 %886
      %888 = vrot.lane.b32.xlu0 %v766, 24
      %v889 = vpop.permute.xlu0 %888
      %890 = vrot.lane.b32.xlu0 %v767, 24
      %v891 = vpop.permute.xlu0 %890
      %892 = vrot.lane.b32.xlu0 %v768, 24
      %v893 = vpop.permute.xlu0 %892
      %894 = vrot.lane.b32.xlu0 %v769, 24
      %v895 = vpop.permute.xlu0 %894
      %896 = vrot.lane.b32.xlu0 %v770, 24
      %v897 = vpop.permute.xlu0 %896
      %898 = vrot.lane.b32.xlu0 %v771, 24
      %v899 = vpop.permute.xlu0 %898
      %900 = vrot.lane.b32.xlu0 %v772, 24
      %v901 = vpop.permute.xlu0 %900
      %918 = vrot.lane.b32.xlu0 %v773, 32
      %v919 = vpop.permute.xlu0 %918
      %920 = vrot.lane.b32.xlu0 %v774, 32
      %v921 = vpop.permute.xlu0 %920
      %922 = vrot.lane.b32.xlu0 %v775, 32
      %v923 = vpop.permute.xlu0 %922
      %924 = vrot.lane.b32.xlu0 %v776, 32
      %v925 = vpop.permute.xlu0 %924
      %926 = vrot.lane.b32.xlu0 %v777, 32
      %v927 = vpop.permute.xlu0 %926
      %928 = vrot.lane.b32.xlu0 %v778, 32
      %v929 = vpop.permute.xlu0 %928
      %930 = vrot.lane.b32.xlu0 %v779, 32
      %v931 = vpop.permute.xlu0 %930
      %932 = vrot.lane.b32.xlu0 %v780, 32
      %v933 = vpop.permute.xlu0 %932
      %950 = vrot.lane.b32.xlu0 %v781, 40
      %v951 = vpop.permute.xlu0 %950
      %952 = vrot.lane.b32.xlu0 %v782, 40
      %v953 = vpop.permute.xlu0 %952
      %954 = vrot.lane.b32.xlu0 %v783, 40
      %v955 = vpop.permute.xlu0 %954
      %956 = vrot.lane.b32.xlu0 %v784, 40
      %v957 = vpop.permute.xlu0 %956
      %958 = vrot.lane.b32.xlu0 %v785, 40
      %v959 = vpop.permute.xlu0 %958
      %960 = vrot.lane.b32.xlu0 %v786, 40
      %v961 = vpop.permute.xlu0 %960
      %962 = vrot.lane.b32.xlu0 %v787, 40
      %v963 = vpop.permute.xlu0 %962
      %964 = vrot.lane.b32.xlu0 %v788, 40
      %v965 = vpop.permute.xlu0 %964
      %982 = vrot.lane.b32.xlu0 %v790, 48
      %v983 = vpop.permute.xlu0 %982
      %984 = vrot.lane.b32.xlu0 %v791, 48
      %v985 = vpop.permute.xlu0 %984
      %986 = vrot.lane.b32.xlu0 %v792, 48
      %v987 = vpop.permute.xlu0 %986
      %988 = vrot.lane.b32.xlu0 %v793, 48
      %v989 = vpop.permute.xlu0 %988
      %990 = vrot.lane.b32.xlu0 %v794, 48
      %v991 = vpop.permute.xlu0 %990
      %992 = vrot.lane.b32.xlu0 %v795, 48
      %v993 = vpop.permute.xlu0 %992
      %994 = vrot.lane.b32.xlu0 %v796, 48
      %v995 = vpop.permute.xlu0 %994
      %996 = vrot.lane.b32.xlu0 %v797, 48
      %v997 = vpop.permute.xlu0 %996
      %1014 = vrot.lane.b32.xlu0 %v798, 56
      %v1015 = vpop.permute.xlu0 %1014
      %1016 = vrot.lane.b32.xlu0 %v799, 56
      %v1017 = vpop.permute.xlu0 %1016
      %1018 = vrot.lane.b32.xlu0 %v800, 56
      %v1019 = vpop.permute.xlu0 %1018
      %1020 = vrot.lane.b32.xlu0 %v801, 56
      %v1021 = vpop.permute.xlu0 %1020
      %1022 = vrot.lane.b32.xlu0 %v802, 56
      %v1023 = vpop.permute.xlu0 %1022
      %1024 = vrot.lane.b32.xlu0 %v803, 56
      %v1025 = vpop.permute.xlu0 %1024
      %1026 = vrot.lane.b32.xlu0 %v804, 56
      %v1027 = vpop.permute.xlu0 %1026
      %1028 = vrot.lane.b32.xlu0 %v805, 56
      %v1029 = vpop.permute.xlu0 %1028
      %1046 = vrot.lane.b32.xlu0 %v806, 64
      %v1047 = vpop.permute.xlu0 %1046
      %1048 = vrot.lane.b32.xlu0 %v807, 64
      %v1049 = vpop.permute.xlu0 %1048
      %1050 = vrot.lane.b32.xlu0 %v808, 64
      %v1051 = vpop.permute.xlu0 %1050
      %1052 = vrot.lane.b32.xlu0 %v809, 64
      %v1053 = vpop.permute.xlu0 %1052
      %1054 = vrot.lane.b32.xlu0 %v810, 64
      %v1055 = vpop.permute.xlu0 %1054
      %1056 = vrot.lane.b32.xlu0 %v811, 64
      %v1057 = vpop.permute.xlu0 %1056
      %1058 = vrot.lane.b32.xlu0 %v812, 64
      %v1059 = vpop.permute.xlu0 %1058
      %1060 = vrot.lane.b32.xlu0 %v813, 64
      %v1061 = vpop.permute.xlu0 %1060
      %v1070 = vsel %vm710, %v741, %v823
      %v1071 = vsel %vm710, %v742, %v825
      %v1072 = vsel %vm710, %v743, %v827
      %v1073 = vsel %vm710, %v744, %v829
      %v1074 = vsel %vm710, %v745, %v831
      %v1075 = vsel %vm710, %v746, %v833
      %v1076 = vsel %vm710, %v747, %v835
      %v1077 = vsel %vm710, %v748, %v837
      %v1078 = vsel %vm436, %v1070, %v855
      %v1079 = vsel %vm436, %v1071, %v857
      %v1080 = vsel %vm436, %v1072, %v859
      %v1081 = vsel %vm436, %v1073, %v861
      %v1082 = vsel %vm436, %v1074, %v863
      %v1083 = vsel %vm436, %v1075, %v865
      %v1084 = vsel %vm436, %v1076, %v867
      %v1085 = vsel %vm436, %v1077, %v869
      %vm1086 = vcmask 195584
      %v1087 = vsel %vm1086, %v1078, %v887
      %v1088 = vsel %vm1086, %v1079, %v889
      %v1089 = vsel %vm1086, %v1080, %v891
      %v1090 = vsel %vm1086, %v1081, %v893
      %v1091 = vsel %vm1086, %v1082, %v895
      %v1092 = vsel %vm1086, %v1083, %v897
      %v1093 = vsel %vm1086, %v1084, %v899
      %v1094 = vsel %vm1086, %v1085, %v901
      %v1095 = vsel %vm445, %v1087, %v919
      %v1096 = vsel %vm445, %v1088, %v921
      %v1097 = vsel %vm445, %v1089, %v923
      %v1098 = vsel %vm445, %v1090, %v925
      %v1099 = vsel %vm445, %v1091, %v927
      %v1100 = vsel %vm445, %v1092, %v929
      %v1101 = vsel %vm445, %v1093, %v931
      %v1102 = vsel %vm445, %v1094, %v933
      %vm1103 = vcmask 326656
      %v1104 = vsel %vm1103, %v1095, %v951
      %v1105 = vsel %vm1103, %v1096, %v953
      %v1106 = vsel %vm1103, %v1097, %v955
      %v1107 = vsel %vm1103, %v1098, %v957
      %v1108 = vsel %vm1103, %v1099, %v959
      %v1109 = vsel %vm1103, %v1100, %v961
      %v1110 = vsel %vm1103, %v1101, %v963
      %v1111 = vsel %vm1103, %v1102, %v965
      %v1112 = vsel %vm454, %v1104, %v983
      %v1113 = vsel %vm454, %v1105, %v985
      %v1114 = vsel %vm454, %v1106, %v987
      %v1115 = vsel %vm454, %v1107, %v989
      %v1116 = vsel %vm454, %v1108, %v991
      %v1117 = vsel %vm454, %v1109, %v993
      %v1118 = vsel %vm454, %v1110, %v995
      %v1119 = vsel %vm454, %v1111, %v997
      %vm1120 = vcmask 457728
      %v1121 = vsel %vm1120, %v1112, %v1015
      %v1122 = vsel %vm1120, %v1113, %v1017
      %v1123 = vsel %vm1120, %v1114, %v1019
      %v1124 = vsel %vm1120, %v1115, %v1021
      %v1125 = vsel %vm1120, %v1116, %v1023
      %v1126 = vsel %vm1120, %v1117, %v1025
      %v1127 = vsel %vm1120, %v1118, %v1027
      %v1128 = vsel %vm1120, %v1119, %v1029
      %v1129 = vsel %vm499, %v1121, %v1047
      %v1130 = vsel %vm499, %v1122, %v1049
      %v1131 = vsel %vm499, %v1123, %v1051
      %v1132 = vsel %vm499, %v1124, %v1053
      %v1133 = vsel %vm499, %v1125, %v1055
      %v1134 = vsel %vm499, %v1126, %v1057
      %v1135 = vsel %vm499, %v1127, %v1059
      %v1136 = vsel %vm499, %v1128, %v1061
      %v1137 = vpack.c.bf16 %v1130, %v1129
      %v1138 = vpack.c.bf16 %v1132, %v1131
      %v1139 = vpack.c.bf16 %v1134, %v1133
      %v1140 = vpack.c.bf16 %v1136, %v1135
      %v1141 = vld [vmem:[%s5] sm:$0xf]
      %v1142 = vld [vmem:[%s5 + $0x4] sm:$0xf]
      %v1143 = vld [vmem:[%s5 + $0x8] sm:$0xf]
      %v1144 = vld [vmem:[%s5 + $0xc] sm:$0xf]
      %v1145 = vld [vmem:[%s5 + $0x10] sm:$0xf]
      %v1146 = vld [vmem:[%s5 + $0x14] sm:$0xf]
      %v1147 = vld [vmem:[%s5 + $0x18] sm:$0xf]
      %v1148 = vld [vmem:[%s5 + $0x1c] sm:$0xf]
      %v1149 = vld [vmem:[%s5 + $0x20] sm:$0xf]
      %v1159 = vunpack.c.l.b16 %v1141
      %v1160 = vunpack.c.l.b16 %v1142
      %v1161 = vunpack.c.l.b16 %v1143
      %v1162 = vunpack.c.l.b16 %v1144
      %v1163 = vunpack.c.l.b16 %v1145
      %v1164 = vunpack.c.l.b16 %v1146
      %v1165 = vunpack.c.l.b16 %v1147
      %v1166 = vunpack.c.l.b16 %v1148
      %v1167 = vunpack.c.l.b16 %v1149
      %v1168 = vpack.c.b16 %v1160, %v1159
      %v1169 = vpack.c.b16 %v1162, %v1161
      %v1170 = vpack.c.b16 %v1164, %v1163
      %v1171 = vpack.c.b16 %v1166, %v1165
      %v1172 = vpack.c.b16 %v1167, %v1167
      %vm1177 = vcmask 588800
      %v1179 = vsel %vm1177, %v1137, 0
      %v1182 = vsel %vm1177, %v1138, 0
      %v1185 = vsel %vm1177, %v1139, 0
      %v1188 = vsel %vm1177, %v1140, 0
      %vm1190 = vcmask 1043456
      %v1192 = vsel %vm1190, %v1172, 0
      %1194 = vmatprep.subr.bf16.mxu0 0
      %1195 = vmatpush1.bf16.msra.mxu0 %v1168
      %1196 = vmatprep.subr.bf16.mxu0 0
      %1197 = vmatpush1.bf16.msra.mxu0 %v1169
      %1198 = vmatprep.subr.bf16.mxu0 0
      %1199 = vmatpush1.bf16.msra.mxu0 %v1170
      %1200 = vmatprep.subr.bf16.mxu0 0
      %1201 = vmatpush1.bf16.msra.mxu0 %v1171
      %1202 = vmatprep.subr.bf16.mxu0 0
      %1203 = vmatpush1.bf16.msra.mxu0 %v1192
      %1204 = vmatprep.subr.bf16.mxu0 0
      %1205 = vmatpush1.bf16.msra.mxu0 0
      %1206 = vmatprep.subr.bf16.mxu0 0
      %1207 = vmatpush1.bf16.msra.mxu0 0
      %1208 = vmatprep.subr.bf16.mxu0 0
      %1209 = vmatpush1.bf16.msra.mxu0 0
      %1210 = vmatprep.subr.bf16.mxu0 0
      %1211 = vmatpush1.bf16.msra.mxu0 0
      %1212 = vmatprep.subr.bf16.mxu0 0
      %1213 = vmatpush1.bf16.msra.mxu0 0
      %1214 = vmatprep.subr.bf16.mxu0 0
      %1215 = vmatpush1.bf16.msra.mxu0 0
      %1216 = vmatprep.subr.bf16.mxu0 0
      %1217 = vmatpush1.bf16.msra.mxu0 0
      %1218 = vmatprep.subr.bf16.mxu0 0
      %1219 = vmatpush1.bf16.msra.mxu0 0
      %1220 = vmatprep.subr.bf16.mxu0 0
      %1221 = vmatpush1.bf16.msra.mxu0 0
      %1222 = vmatprep.subr.bf16.mxu0 0
      %1223 = vmatpush1.bf16.msra.mxu0 0
      %1224 = vmatprep.subr.bf16.mxu0 0
      %1225 = vmatpush1.bf16.msra.mxu0 0
      %1226 = vmatprep.mubr.bf16.mxu0 0
      %1227 = vmatmul.mubr.bf16.gmra.mrb[0].mxu0 %v1179
      %v1228 = vpop.f32.mrb[0].mxu0
      %v1229 = vadd.f32 %v642, %v1228
      %v1230 = vpop.f32.mrb[0].mxu0
      %v1231 = vpop.f32.mrb[0].mxu0
      %v1232 = vadd.f32 %v645, %v1231
      %v1233 = vpop.f32.mrb[0].mxu0
      %1234 = vmatprep.mubr.bf16.mxu0 0
      %1235 = vmatmul.mubr.bf16.gmra.mrb[0].mxu0 %v1182
      %v1236 = vpop.f32.mrb[0].mxu0
      %v1237 = vadd.f32 %v650, %v1236
      %v1238 = vpop.f32.mrb[0].mxu0
      %v1239 = vpop.f32.mrb[0].mxu0
      %v1240 = vadd.f32 %v653, %v1239
      %v1241 = vpop.f32.mrb[0].mxu0
      %1242 = vmatprep.mubr.bf16.mxu0 0
      %1243 = vmatmul.mubr.bf16.gmra.mrb[0].mxu0 %v1185
      %v1244 = vpop.f32.mrb[0].mxu0
      %v1245 = vadd.f32 %v658, %v1244
      %v1246 = vpop.f32.mrb[0].mxu0
      %v1247 = vpop.f32.mrb[0].mxu0
      %v1248 = vadd.f32 %v661, %v1247
      %v1249 = vpop.f32.mrb[0].mxu0
      %1250 = vmatprep.mubr.bf16.mxu0 0
      %1251 = vmatmul.mubr.bf16.gmra.mrb[0].mxu0 %v1188
      %v1252 = vpop.f32.mrb[0].mxu0
      %v1253 = vadd.f32 %v666, %v1252
      %v1254 = vpop.f32.mrb[0].mxu0
      %v1255 = vpop.f32.mrb[0].mxu0
      %v1256 = vadd.f32 %v669, %v1255
      %v1257 = vpop.f32.mrb[0].mxu0
      %1258 = vdwg.mxu0
      %1259 = vst.msk [vmem:[%s298] sm:$0xff] %vm710, %v1229
      %1260 = vst.msk [vmem:[%s298 + $0x8] sm:$0xff] %vm710, %v1232
      %1261 = vst.msk [vmem:[%s298 + $0x10] sm:$0xff] %vm710, %v1237
      %1262 = vst.msk [vmem:[%s298 + $0x18] sm:$0xff] %vm710, %v1240
      %1263 = vst.msk [vmem:[%s298 + $0x20] sm:$0xff] %vm710, %v1245
      %1264 = vst.msk [vmem:[%s298 + $0x28] sm:$0xff] %vm710, %v1248
      %1265 = vst.msk [vmem:[%s298 + $0x30] sm:$0xff] %vm710, %v1253
      %1266 = vst.msk [vmem:[%s298 + $0x38] sm:$0xff] %vm710, %v1256
      %p1267 = scmp.lt.s32.totalorder %s18, 1
      %s1268 = scalar_select %p1267, %s18, 1
      %s1269 = smul.addr %s1268, 8
      %s1270 = smul.addr %s1269, 8
      %s1271 = scalar_lea.vmem %s7, %s1270
      // Predicated region
      $region49: #{_lambda_.2} parent=47 // pred_check
        %p1272 = pneg %p193
      $region50: #{_lambda_.2} parent=47 // pred_check_branch
        %1274 = sbr.rel (%p1272) target = $region52
      $region51: #{_lambda_.2} parent=47 // pred_region
        _
      $region52: #{_lambda_.2} parent=47 // pred_fallthru
        _
    $region48: #{_lambda_.2} parent=5 // pred_fallthru
      _
    %p1275 = scmp.le.s32.totalorder 2, %s13
    // Predicated region
    $region53: #{_lambda_.2} parent=5 // pred_check
      %p1276 = pneg %p1275
    $region54: #{_lambda_.2} parent=5 // pred_check_branch
      %1278 = sbr.rel (%p1276) target = $region56
    $region55: #{_lambda_.2} parent=5 // pred_region
      %s1279 = ssub.s32 %s13, 2
      // Predicated region
      $region57: #{_lambda_.2} parent=55 // pred_check
        %p1280 = pneg %p199
      $region58: #{_lambda_.2} parent=55 // pred_check_branch
        %1282 = sbr.rel (%p1280) target = $region60
      $region59: #{_lambda_.2} parent=55 // pred_region
        %p1283 = scmp.lt.s32.totalorder %s19, 1
        %s1284 = scalar_select %p1283, %s19, 1
        %s1285 = smul.addr %s1284, 8
        %s1286 = smul.addr %s1285, 8
        %s1287 = scalar_lea.vmem %s7, %s1286
      $region60: #{_lambda_.2} parent=55 // pred_fallthru
        _
    $region56: #{_lambda_.2} parent=5 // pred_fallthru
      _
  $region6: #{_lambda_.2} parent=0 // loop_footer
    %s17 = sadd.s32 1, %s13
  $region7: #{_lambda_.2} parent=0 // loop_footer_branch
    %12 = sbr.rel target = $region3
  $region8: #{_lambda_.2} parent=0 // loop_exit
    _

// kernel: _lambda_.3
$region0: #{_lambda_.3}
  #allocation0 [shape = 'u32[]', space=smem, size = 0x4, offset = 0x4, fixed_abs, tag = 'smem constant byte address 0x4 - core index']
  #allocation1 [shape = 'u32[144,128]{1,0:T(1,128)}', space=vmem, size = 0x12000, scoped, tag = 'internal scratch']
  #allocation2 [shape = 'f32[10,10,8]{2,1,0:T(8,128)}', space=vmem, size = 0x14000, scoped, tag = 'scratch operand']
  #allocation3 [shape = 'f32[10,10,8]{2,1,0:T(8,128)}', space=vmem, size = 0x14000, scoped, tag = 'scratch operand']
  %s0 = inlined_call_operand.vmem [shape: f32[2,8,8,8], index: 0, kind: input, shape index: {}]
  %s1 = inlined_call_operand.vmem [shape: f32[1,8], index: 1, kind: input, shape index: {}]
  %s2 = inlined_call_operand.vmem [shape: f32[1,8], index: 2, kind: input, shape index: {}]
  %s3 = inlined_call_operand.vmem [shape: bf16[72,8], index: 3, kind: input, shape index: {}]
  %s4 = inlined_call_operand.vmem [shape: f32[1,8], index: 4, kind: input, shape index: {}]
  %s5 = inlined_call_operand.vmem [shape: f32[1,8], index: 5, kind: input, shape index: {}]
  %s6 = inlined_call_operand.vmem [shape: bf16[72,8], index: 6, kind: input, shape index: {}]
  %s7 = inlined_call_operand.vmem [shape: f32[2,8,8,8], index: 7, kind: output, shape index: {}]
  %s8 = sld [smem:[#allocation0]]
  $region61: #{_lambda_.3} parent=0
    _
  %s10 = ssub.s32 1, %s8
  %s11 = scalar_select 0, %s10, %s8
  loop: start=0, step=1, limit=4
  $region2: #{_lambda_.3} parent=0 // loop_pre_header
    _
  $region3: #{_lambda_.3} parent=0 // loop_header
    %s13 = sphi 0, %s17
    %p14 = scmp.ge.s32.totalorder %s13, 4
    %s23 = sphi 0, %s25
    %s26 = sphi 0, %s23
    %s27 = sphi 0, %s26
    %s43 = sphi 0, %s27
    %s47 = sphi 0, %s47
    %s49 = sphi 0, %s47
    %s50 = sphi 0, %s49
    %s64 = sphi 0, %s50
    %s68 = sphi 0, %s68
    %s70 = sphi 0, %s68
    %s71 = sphi 0, %s70
    %s85 = sphi 0, %s71
    %s89 = sphi 0, %s89
    %s91 = sphi 0, %s89
    %s92 = sphi 0, %s91
    %s106 = sphi 0, %s92
    %s110 = sphi 0, %s110
    %s112 = sphi 0, %s110
    %s113 = sphi 0, %s112
    %s127 = sphi 0, %s113
    %s131 = sphi 0, %s131
    %s133 = sphi 0, %s131
    %s134 = sphi 0, %s133
    %s148 = sphi 0, %s134
    %s152 = sphi 0, %s152
    %s154 = sphi 0, %s152
    %s155 = sphi 0, %s154
    %s169 = sphi 0, %s155
    %s175 = sphi 0, %s177
    %s178 = sphi 0, %s175
    %s179 = sphi 0, %s178
    %s195 = sphi 0, %s179
  $region4: #{_lambda_.3} parent=0 // loop_header_branch
    %16 = sbr.rel (%p14) target = $region8
  $region5: #{_lambda_.3} parent=0 // loop_body
    %s18 = ssub.s32 %s13, 1
    %s19 = ssub.s32 %s13, 2
    %s20 = sadd.s32 %s13, 1
    %s21 = ssub.s32 %s13, %s20
    %p22 = scmp.eq.s32.totalorder %s21, 0
    %s24 = sadd.s32 %s23, 1
    %s25 = scalar_select %p22, %s23, %s24
    %p28 = pneg %p22
    %p29 = scmp.eq.s32.totalorder %s13, 1
    %p30 = por %p28, %p29
    %p31 = scmp.ne.s32.totalorder %s23, %s26
    %p32 = scmp.eq.s32.totalorder %s13, 0
    %p33 = por %p31, %p32
    %p34 = scmp.ne.s32.totalorder %s23, %s26
    %p35 = scmp.eq.s32.totalorder %s18, 1
    %p36 = por %p34, %p35
    %p37 = scmp.ne.s32.totalorder %s26, %s27
    %p38 = scmp.eq.s32.totalorder %s18, 0
    %p39 = por %p37, %p38
    %p40 = scmp.ne.s32.totalorder %s26, %s27
    %p41 = scmp.eq.s32.totalorder %s19, 1
    %p42 = por %p40, %p41
    %p44 = scmp.ne.s32.totalorder %s27, %s43
    %p45 = scmp.eq.s32.totalorder %s19, 0
    %p46 = por %p44, %p45
    %s48 = sadd.s32 %s47, 1
    %p51 = scmp.eq.s32.totalorder %s13, 1
    %p52 = scmp.ne.s32.totalorder %s47, %s49
    %p53 = scmp.eq.s32.totalorder %s13, 0
    %p54 = por %p52, %p53
    %p55 = scmp.ne.s32.totalorder %s47, %s49
    %p56 = scmp.eq.s32.totalorder %s18, 1
    %p57 = por %p55, %p56
    %p58 = scmp.ne.s32.totalorder %s49, %s50
    %p59 = scmp.eq.s32.totalorder %s18, 0
    %p60 = por %p58, %p59
    %p61 = scmp.ne.s32.totalorder %s49, %s50
    %p62 = scmp.eq.s32.totalorder %s19, 1
    %p63 = por %p61, %p62
    %p65 = scmp.ne.s32.totalorder %s50, %s64
    %p66 = scmp.eq.s32.totalorder %s19, 0
    %p67 = por %p65, %p66
    %s69 = sadd.s32 %s68, 1
    %p72 = scmp.eq.s32.totalorder %s13, 1
    %p73 = scmp.ne.s32.totalorder %s68, %s70
    %p74 = scmp.eq.s32.totalorder %s13, 0
    %p75 = por %p73, %p74
    %p76 = scmp.ne.s32.totalorder %s68, %s70
    %p77 = scmp.eq.s32.totalorder %s18, 1
    %p78 = por %p76, %p77
    %p79 = scmp.ne.s32.totalorder %s70, %s71
    %p80 = scmp.eq.s32.totalorder %s18, 0
    %p81 = por %p79, %p80
    %p82 = scmp.ne.s32.totalorder %s70, %s71
    %p83 = scmp.eq.s32.totalorder %s19, 1
    %p84 = por %p82, %p83
    %p86 = scmp.ne.s32.totalorder %s71, %s85
    %p87 = scmp.eq.s32.totalorder %s19, 0
    %p88 = por %p86, %p87
    %s90 = sadd.s32 %s89, 1
    %p93 = scmp.eq.s32.totalorder %s13, 1
    %p94 = scmp.ne.s32.totalorder %s89, %s91
    %p95 = scmp.eq.s32.totalorder %s13, 0
    %p96 = por %p94, %p95
    %p97 = scmp.ne.s32.totalorder %s89, %s91
    %p98 = scmp.eq.s32.totalorder %s18, 1
    %p99 = por %p97, %p98
    %p100 = scmp.ne.s32.totalorder %s91, %s92
    %p101 = scmp.eq.s32.totalorder %s18, 0
    %p102 = por %p100, %p101
    %p103 = scmp.ne.s32.totalorder %s91, %s92
    %p104 = scmp.eq.s32.totalorder %s19, 1
    %p105 = por %p103, %p104
    %p107 = scmp.ne.s32.totalorder %s92, %s106
    %p108 = scmp.eq.s32.totalorder %s19, 0
    %p109 = por %p107, %p108
    %s111 = sadd.s32 %s110, 1
    %p114 = scmp.eq.s32.totalorder %s13, 1
    %p115 = scmp.ne.s32.totalorder %s110, %s112
    %p116 = scmp.eq.s32.totalorder %s13, 0
    %p117 = por %p115, %p116
    %p118 = scmp.ne.s32.totalorder %s110, %s112
    %p119 = scmp.eq.s32.totalorder %s18, 1
    %p120 = por %p118, %p119
    %p121 = scmp.ne.s32.totalorder %s112, %s113
    %p122 = scmp.eq.s32.totalorder %s18, 0
    %p123 = por %p121, %p122
    %p124 = scmp.ne.s32.totalorder %s112, %s113
    %p125 = scmp.eq.s32.totalorder %s19, 1
    %p126 = por %p124, %p125
    %p128 = scmp.ne.s32.totalorder %s113, %s127
    %p129 = scmp.eq.s32.totalorder %s19, 0
    %p130 = por %p128, %p129
    %s132 = sadd.s32 %s131, 1
    %p135 = scmp.eq.s32.totalorder %s13, 1
    %p136 = scmp.ne.s32.totalorder %s131, %s133
    %p137 = scmp.eq.s32.totalorder %s13, 0
    %p138 = por %p136, %p137
    %p139 = scmp.ne.s32.totalorder %s131, %s133
    %p140 = scmp.eq.s32.totalorder %s18, 1
    %p141 = por %p139, %p140
    %p142 = scmp.ne.s32.totalorder %s133, %s134
    %p143 = scmp.eq.s32.totalorder %s18, 0
    %p144 = por %p142, %p143
    %p145 = scmp.ne.s32.totalorder %s133, %s134
    %p146 = scmp.eq.s32.totalorder %s19, 1
    %p147 = por %p145, %p146
    %p149 = scmp.ne.s32.totalorder %s134, %s148
    %p150 = scmp.eq.s32.totalorder %s19, 0
    %p151 = por %p149, %p150
    %s153 = sadd.s32 %s152, 1
    %p156 = scmp.eq.s32.totalorder %s13, 1
    %p157 = scmp.ne.s32.totalorder %s152, %s154
    %p158 = scmp.eq.s32.totalorder %s13, 0
    %p159 = por %p157, %p158
    %p160 = scmp.ne.s32.totalorder %s152, %s154
    %p161 = scmp.eq.s32.totalorder %s18, 1
    %p162 = por %p160, %p161
    %p163 = scmp.ne.s32.totalorder %s154, %s155
    %p164 = scmp.eq.s32.totalorder %s18, 0
    %p165 = por %p163, %p164
    %p166 = scmp.ne.s32.totalorder %s154, %s155
    %p167 = scmp.eq.s32.totalorder %s19, 1
    %p168 = por %p166, %p167
    %p170 = scmp.ne.s32.totalorder %s155, %s169
    %p171 = scmp.eq.s32.totalorder %s19, 0
    %p172 = por %p170, %p171
    %s173 = ssub.s32 %s13, %s20
    %p174 = scmp.eq.s32.totalorder %s173, 0
    %s176 = sadd.s32 %s175, 1
    %s177 = scalar_select %p174, %s175, %s176
    %p180 = pneg %p174
    %p181 = scmp.eq.s32.totalorder %s13, 1
    %p182 = por %p180, %p181
    %p183 = scmp.ne.s32.totalorder %s175, %s178
    %p184 = scmp.eq.s32.totalorder %s13, 0
    %p185 = por %p183, %p184
    %p186 = scmp.ne.s32.totalorder %s175, %s178
    %p187 = scmp.eq.s32.totalorder %s18, 1
    %p188 = por %p186, %p187
    %p189 = scmp.ne.s32.totalorder %s178, %s179
    %p190 = scmp.eq.s32.totalorder %s18, 0
    %p191 = por %p189, %p190
    %p192 = scmp.ne.s32.totalorder %s178, %s179
    %p193 = scmp.eq.s32.totalorder %s19, 1
    %p194 = por %p192, %p193
    %p196 = scmp.ne.s32.totalorder %s179, %s195
    %p197 = scmp.eq.s32.totalorder %s19, 0
    %p198 = por %p196, %p197
    %p199 = scmp.le.s32.totalorder 1, %s13
    %p200 = scmp.lt.s32.totalorder %s13, 3
    %p201 = pnand %p199, %p200
    %p202 = pneg %p201
    // Predicated region
    $region9: #{_lambda_.3} parent=5 // pred_check
      _
    $region10: #{_lambda_.3} parent=5 // pred_check_branch
      %204 = sbr.rel (%p201) target = $region12
    $region11: #{_lambda_.3} parent=5 // pred_region
      %s205 = ssub.s32 %s13, 1
      // Predicated region
      $region13: #{_lambda_.3} parent=11 // pred_check
        %p206 = pneg %p60
      $region14: #{_lambda_.3} parent=11 // pred_check_branch
        %208 = sbr.rel (%p206) target = $region16
      $region15: #{_lambda_.3} parent=11 // pred_region
        _
      $region16: #{_lambda_.3} parent=11 // pred_fallthru
        _
      // Predicated region
      $region17: #{_lambda_.3} parent=11 // pred_check
        %p209 = pneg %p81
      $region18: #{_lambda_.3} parent=11 // pred_check_branch
        %211 = sbr.rel (%p209) target = $region20
      $region19: #{_lambda_.3} parent=11 // pred_region
        _
      $region20: #{_lambda_.3} parent=11 // pred_fallthru
        _
      // Predicated region
      $region21: #{_lambda_.3} parent=11 // pred_check
        %p212 = pneg %p102
      $region22: #{_lambda_.3} parent=11 // pred_check_branch
        %214 = sbr.rel (%p212) target = $region24
      $region23: #{_lambda_.3} parent=11 // pred_region
        _
      $region24: #{_lambda_.3} parent=11 // pred_fallthru
        _
      // Predicated region
      $region25: #{_lambda_.3} parent=11 // pred_check
        %p215 = pneg %p123
      $region26: #{_lambda_.3} parent=11 // pred_check_branch
        %217 = sbr.rel (%p215) target = $region28
      $region27: #{_lambda_.3} parent=11 // pred_region
        _
      $region28: #{_lambda_.3} parent=11 // pred_fallthru
        _
      // Predicated region
      $region29: #{_lambda_.3} parent=11 // pred_check
        %p218 = pneg %p144
      $region30: #{_lambda_.3} parent=11 // pred_check_branch
        %220 = sbr.rel (%p218) target = $region32
      $region31: #{_lambda_.3} parent=11 // pred_region
        _
      $region32: #{_lambda_.3} parent=11 // pred_fallthru
        _
      // Predicated region
      $region33: #{_lambda_.3} parent=11 // pred_check
        %p221 = pneg %p165
      $region34: #{_lambda_.3} parent=11 // pred_check_branch
        %223 = sbr.rel (%p221) target = $region36
      $region35: #{_lambda_.3} parent=11 // pred_region
        _
      $region36: #{_lambda_.3} parent=11 // pred_fallthru
        _
    $region12: #{_lambda_.3} parent=5 // pred_fallthru
      _
    %p224 = scmp.lt.s32.totalorder %s13, 2
    // Predicated region
    $region37: #{_lambda_.3} parent=5 // pred_check
      %p225 = pneg %p224
    $region38: #{_lambda_.3} parent=5 // pred_check_branch
      %227 = sbr.rel (%p225) target = $region40
    $region39: #{_lambda_.3} parent=5 // pred_region
      // Predicated region
      $region41: #{_lambda_.3} parent=39 // pred_check
        %p228 = pneg %p33
      $region42: #{_lambda_.3} parent=39 // pred_check_branch
        %230 = sbr.rel (%p228) target = $region44
      $region43: #{_lambda_.3} parent=39 // pred_region
        %p231 = scmp.lt.s32.totalorder %s13, 1
        %s232 = scalar_select %p231, %s13, 1
        %s233 = smul.addr %s232, 8
        %s234 = smul.addr %s233, 8
        %s235 = scalar_lea.vmem %s0, %s234
      $region44: #{_lambda_.3} parent=39 // pred_fallthru
        _
    $region40: #{_lambda_.3} parent=5 // pred_fallthru
      _
    %p236 = scmp.le.s32.totalorder 1, %s13
    %p237 = scmp.lt.s32.totalorder %s13, 3
    %p238 = pnand %p236, %p237
    %p239 = pneg %p238
    // Predicated region
    $region45: #{_lambda_.3} parent=5 // pred_check
      _
    $region46: #{_lambda_.3} parent=5 // pred_check_branch
      %241 = sbr.rel (%p238) target = $region48
    $region47: #{_lambda_.3} parent=5 // pred_region
      %s242 = ssub.s32 %s13, 1
      %p243 = scmp.lt.s32.totalorder %s18, 1
      %s244 = scalar_select %p243, %s18, 1
      %s245 = smul.addr %s244, 8
      %s246 = smul.addr %s245, 8
      %s247 = scalar_lea.vmem %s0, %s246
      %p248 = pneg %p39
      %p249 = pneg %p36
      %p250 = pneg %p60
      %p251 = pneg %p57
      %p252 = pneg %p81
      %p253 = pneg %p78
      %p254 = pneg %p102
      %p255 = pneg %p99
      %p256 = pneg %p123
      %p257 = pneg %p120
      %p258 = pneg %p144
      %p259 = pneg %p141
      %p260 = pneg %p165
      %p261 = pneg %p162
      %p262 = pneg %p191
      %p263 = pneg %p188
      %p264 = scmp.lt.s32.totalorder %s18, 1
      %s265 = scalar_select %p264, %s18, 1
      %s266 = smul.addr %s265, 8
      %s267 = smul.addr %s266, 8
      %s268 = scalar_lea.vmem %s7, %s267
      %p269 = scmp.lt.s32.totalorder %s18, 1
      %s270 = scalar_select %p269, %s18, 1
      %s271 = smul.addr %s270, 8
      %s272 = smul.addr %s271, 8
      %s273 = scalar_lea.vmem %s0, %s272
      %p274 = scmp.lt.s32.totalorder %s18, 1
      %s275 = scalar_select %p274, %s18, 1
      %s276 = smul.addr %s275, 8
      %s277 = smul.addr %s276, 8
      %s278 = scalar_lea.vmem %s7, %s277
      %v280 = vld [vmem:[%s273] sm:$0xff]
      %v281 = vld [vmem:[%s273 + $0x8] sm:$0xff]
      %v282 = vld [vmem:[%s273 + $0x10] sm:$0xff]
      %v283 = vld [vmem:[%s273 + $0x18] sm:$0xff]
      %v284 = vld [vmem:[%s273 + $0x20] sm:$0xff]
      %v285 = vld [vmem:[%s273 + $0x28] sm:$0xff]
      %v286 = vld [vmem:[%s273 + $0x30] sm:$0xff]
      %v287 = vld [vmem:[%s273 + $0x38] sm:$0xff]
      %v288 = vld [vmem:[%s1] sm:$0x1]
      %v290 = vlaneseq
      %v291 = vshrl.u32 %v290, 7
      %v292 = vsub.s32 0, %v291
      %v293 = vrot.slane %v288, %v292
      %v295 = vmul.f32 %v280, %v293
      %v296 = vmul.f32 %v281, %v293
      %v297 = vmul.f32 %v282, %v293
      %v298 = vmul.f32 %v283, %v293
      %v299 = vmul.f32 %v284, %v293
      %v300 = vmul.f32 %v285, %v293
      %v301 = vmul.f32 %v286, %v293
      %v302 = vmul.f32 %v287, %v293
      %v303 = vld [vmem:[%s2] sm:$0x1]
      %v305 = vlaneseq
      %v306 = vshrl.u32 %v305, 7
      %v307 = vsub.s32 0, %v306
      %v308 = vrot.slane %v303, %v307
      %v310 = vadd.f32 %v295, %v308
      %v311 = vadd.f32 %v296, %v308
      %v312 = vadd.f32 %v297, %v308
      %v313 = vadd.f32 %v298, %v308
      %v314 = vadd.f32 %v299, %v308
      %v315 = vadd.f32 %v300, %v308
      %v316 = vadd.f32 %v301, %v308
      %v317 = vadd.f32 %v302, %v308
      %v318 = vmax.f32 %v310, 0.0
      %v319 = vmax.f32 %v311, 0.0
      %v320 = vmax.f32 %v312, 0.0
      %v321 = vmax.f32 %v313, 0.0
      %v322 = vmax.f32 %v314, 0.0
      %v323 = vmax.f32 %v315, 0.0
      %v324 = vmax.f32 %v316, 0.0
      %v325 = vmax.f32 %v317, 0.0
      %vm326 = vcmask 64512
      %327 = vst.msk [vmem:[#allocation2] sm:$0xff] %vm326, 0.0
      %vm328 = vcmask 58368
      %329 = vst.msk [vmem:[#allocation2 + $0x8] sm:$0x3] %vm328, 0.0
      %330 = vst.msk [vmem:[#allocation2 + $0x10] sm:$0xff] %vm326, 0.0
      %331 = vst.msk [vmem:[#allocation2 + $0x18] sm:$0x3] %vm328, 0.0
      %332 = vst.msk [vmem:[#allocation2 + $0x20] sm:$0xff] %vm326, 0.0
      %333 = vst.msk [vmem:[#allocation2 + $0x28] sm:$0x3] %vm328, 0.0
      %334 = vst.msk [vmem:[#allocation2 + $0x30] sm:$0xff] %vm326, 0.0
      %335 = vst.msk [vmem:[#allocation2 + $0x38] sm:$0x3] %vm328, 0.0
      %336 = vst.msk [vmem:[#allocation2 + $0x40] sm:$0xff] %vm326, 0.0
      %337 = vst.msk [vmem:[#allocation2 + $0x48] sm:$0x3] %vm328, 0.0
      %338 = vst.msk [vmem:[#allocation2 + $0x50] sm:$0xff] %vm326, 0.0
      %339 = vst.msk [vmem:[#allocation2 + $0x58] sm:$0x3] %vm328, 0.0
      %340 = vst.msk [vmem:[#allocation2 + $0x60] sm:$0xff] %vm326, 0.0
      %341 = vst.msk [vmem:[#allocation2 + $0x68] sm:$0x3] %vm328, 0.0
      %342 = vst.msk [vmem:[#allocation2 + $0x70] sm:$0xff] %vm326, 0.0
      %343 = vst.msk [vmem:[#allocation2 + $0x78] sm:$0x3] %vm328, 0.0
      %344 = vst.msk [vmem:[#allocation2 + $0x80] sm:$0xff] %vm326, 0.0
      %345 = vst.msk [vmem:[#allocation2 + $0x88] sm:$0x3] %vm328, 0.0
      %346 = vst.msk [vmem:[#allocation2 + $0x90] sm:$0xff] %vm326, 0.0
      %347 = vst.msk [vmem:[#allocation2 + $0x98] sm:$0x3] %vm328, 0.0
      %s348 = scalar_lea.vmem [#allocation2], 16
      %349 = vst.msk [vmem:[%s348 + $0x1] sm:$0xff] %vm326, %v318
      %350 = vst.msk [vmem:[%s348 + $0x11] sm:$0xff] %vm326, %v319
      %351 = vst.msk [vmem:[%s348 + $0x21] sm:$0xff] %vm326, %v320
      %352 = vst.msk [vmem:[%s348 + $0x31] sm:$0xff] %vm326, %v321
      %353 = vst.msk [vmem:[%s348 + $0x41] sm:$0xff] %vm326, %v322
      %354 = vst.msk [vmem:[%s348 + $0x51] sm:$0xff] %vm326, %v323
      %355 = vst.msk [vmem:[%s348 + $0x61] sm:$0xff] %vm326, %v324
      %356 = vst.msk [vmem:[%s348 + $0x71] sm:$0xff] %vm326, %v325
      %v357 = vld [vmem:[#allocation2] sm:$0xff]
      %v358 = vld [vmem:[#allocation2 + $0x10] sm:$0xff]
      %v359 = vld [vmem:[#allocation2 + $0x20] sm:$0xff]
      %v360 = vld [vmem:[#allocation2 + $0x30] sm:$0xff]
      %v361 = vld [vmem:[#allocation2 + $0x40] sm:$0xff]
      %v362 = vld [vmem:[#allocation2 + $0x50] sm:$0xff]
      %v363 = vld [vmem:[#allocation2 + $0x60] sm:$0xff]
      %v364 = vld [vmem:[#allocation2 + $0x70] sm:$0xff]
      %v365 = vld [vmem:[#allocation2 + $0x1] sm:$0xff]
      %v366 = vld [vmem:[#allocation2 + $0x11] sm:$0xff]
      %v367 = vld [vmem:[#allocation2 + $0x21] sm:$0xff]
      %v368 = vld [vmem:[#allocation2 + $0x31] sm:$0xff]
      %v369 = vld [vmem:[#allocation2 + $0x41] sm:$0xff]
      %v370 = vld [vmem:[#allocation2 + $0x51] sm:$0xff]
      %v371 = vld [vmem:[#allocation2 + $0x61] sm:$0xff]
      %v372 = vld [vmem:[#allocation2 + $0x71] sm:$0xff]
      %v373 = vld [vmem:[#allocation2 + $0x2] sm:$0xff]
      %v374 = vld [vmem:[#allocation2 + $0x12] sm:$0xff]
      %v375 = vld [vmem:[#allocation2 + $0x22] sm:$0xff]
      %v376 = vld [vmem:[#allocation2 + $0x32] sm:$0xff]
      %v377 = vld [vmem:[#allocation2 + $0x42] sm:$0xff]
      %v378 = vld [vmem:[#allocation2 + $0x52] sm:$0xff]
      %v379 = vld [vmem:[#allocation2 + $0x62] sm:$0xff]
      %v380 = vld [vmem:[#allocation2 + $0x72] sm:$0xff]
      %v381 = vld [vmem:[%s348] sm:$0xff]
      %v382 = vld [vmem:[%s348 + $0x10] sm:$0xff]
      %v383 = vld [vmem:[%s348 + $0x20] sm:$0xff]
      %v384 = vld [vmem:[%s348 + $0x30] sm:$0xff]
      %v385 = vld [vmem:[%s348 + $0x40] sm:$0xff]
      %v386 = vld [vmem:[%s348 + $0x50] sm:$0xff]
      %v387 = vld [vmem:[%s348 + $0x60] sm:$0xff]
      %v388 = vld [vmem:[%s348 + $0x70] sm:$0xff]
      %v389 = vld [vmem:[%s348 + $0x1] sm:$0xff]
      %v390 = vld [vmem:[%s348 + $0x11] sm:$0xff]
      %v391 = vld [vmem:[%s348 + $0x21] sm:$0xff]
      %v392 = vld [vmem:[%s348 + $0x31] sm:$0xff]
      %v393 = vld [vmem:[%s348 + $0x41] sm:$0xff]
      %v394 = vld [vmem:[%s348 + $0x51] sm:$0xff]
      %v395 = vld [vmem:[%s348 + $0x61] sm:$0xff]
      %v396 = vld [vmem:[%s348 + $0x71] sm:$0xff]
      %v397 = vld [vmem:[%s348 + $0x2] sm:$0xff]
      %v398 = vld [vmem:[%s348 + $0x12] sm:$0xff]
      %v399 = vld [vmem:[%s348 + $0x22] sm:$0xff]
      %v400 = vld [vmem:[%s348 + $0x32] sm:$0xff]
      %v401 = vld [vmem:[%s348 + $0x42] sm:$0xff]
      %v402 = vld [vmem:[%s348 + $0x52] sm:$0xff]
      %v403 = vld [vmem:[%s348 + $0x62] sm:$0xff]
      %v404 = vld [vmem:[%s348 + $0x72] sm:$0xff]
      %s405 = scalar_lea.vmem [#allocation2], 32
      %v406 = vld [vmem:[%s405] sm:$0xff]
      %v407 = vld [vmem:[%s405 + $0x10] sm:$0xff]
      %v408 = vld [vmem:[%s405 + $0x20] sm:$0xff]
      %v409 = vld [vmem:[%s405 + $0x30] sm:$0xff]
      %v410 = vld [vmem:[%s405 + $0x40] sm:$0xff]
      %v411 = vld [vmem:[%s405 + $0x50] sm:$0xff]
      %v412 = vld [vmem:[%s405 + $0x60] sm:$0xff]
      %v413 = vld [vmem:[%s405 + $0x70] sm:$0xff]
      %v414 = vld [vmem:[%s405 + $0x1] sm:$0xff]
      %v415 = vld [vmem:[%s405 + $0x11] sm:$0xff]
      %v416 = vld [vmem:[%s405 + $0x21] sm:$0xff]
      %v417 = vld [vmem:[%s405 + $0x31] sm:$0xff]
      %v418 = vld [vmem:[%s405 + $0x41] sm:$0xff]
      %v419 = vld [vmem:[%s405 + $0x51] sm:$0xff]
      %v420 = vld [vmem:[%s405 + $0x61] sm:$0xff]
      %v421 = vld [vmem:[%s405 + $0x71] sm:$0xff]
      %v422 = vld [vmem:[%s405 + $0x2] sm:$0xff]
      %v423 = vld [vmem:[%s405 + $0x12] sm:$0xff]
      %v424 = vld [vmem:[%s405 + $0x22] sm:$0xff]
      %v425 = vld [vmem:[%s405 + $0x32] sm:$0xff]
      %v426 = vld [vmem:[%s405 + $0x42] sm:$0xff]
      %v427 = vld [vmem:[%s405 + $0x52] sm:$0xff]
      %v428 = vld [vmem:[%s405 + $0x62] sm:$0xff]
      %v429 = vld [vmem:[%s405 + $0x72] sm:$0xff]
      %438 = vrot.lane.b32.xlu0 %v365, 8
      %v439 = vpop.permute.xlu0 %438
      %440 = vrot.lane.b32.xlu0 %v366, 8
      %v441 = vpop.permute.xlu0 %440
      %442 = vrot.lane.b32.xlu0 %v367, 8
      %v443 = vpop.permute.xlu0 %442
      %444 = vrot.lane.b32.xlu0 %v368, 8
      %v445 = vpop.permute.xlu0 %444
      %446 = vrot.lane.b32.xlu0 %v369, 8
      %v447 = vpop.permute.xlu0 %446
      %448 = vrot.lane.b32.xlu0 %v370, 8
      %v449 = vpop.permute.xlu0 %448
      %450 = vrot.lane.b32.xlu0 %v371, 8
      %v451 = vpop.permute.xlu0 %450
      %452 = vrot.lane.b32.xlu0 %v372, 8
      %v453 = vpop.permute.xlu0 %452
      %470 = vrot.lane.b32.xlu0 %v373, 16
      %v471 = vpop.permute.xlu0 %470
      %472 = vrot.lane.b32.xlu0 %v374, 16
      %v473 = vpop.permute.xlu0 %472
      %474 = vrot.lane.b32.xlu0 %v375, 16
      %v475 = vpop.permute.xlu0 %474
      %476 = vrot.lane.b32.xlu0 %v376, 16
      %v477 = vpop.permute.xlu0 %476
      %478 = vrot.lane.b32.xlu0 %v377, 16
      %v479 = vpop.permute.xlu0 %478
      %480 = vrot.lane.b32.xlu0 %v378, 16
      %v481 = vpop.permute.xlu0 %480
      %482 = vrot.lane.b32.xlu0 %v379, 16
      %v483 = vpop.permute.xlu0 %482
      %484 = vrot.lane.b32.xlu0 %v380, 16
      %v485 = vpop.permute.xlu0 %484
      %502 = vrot.lane.b32.xlu0 %v381, 24
      %v503 = vpop.permute.xlu0 %502
      %504 = vrot.lane.b32.xlu0 %v382, 24
      %v505 = vpop.permute.xlu0 %504
      %506 = vrot.lane.b32.xlu0 %v383, 24
      %v507 = vpop.permute.xlu0 %506
      %508 = vrot.lane.b32.xlu0 %v384, 24
      %v509 = vpop.permute.xlu0 %508
      %510 = vrot.lane.b32.xlu0 %v385, 24
      %v511 = vpop.permute.xlu0 %510
      %512 = vrot.lane.b32.xlu0 %v386, 24
      %v513 = vpop.permute.xlu0 %512
      %514 = vrot.lane.b32.xlu0 %v387, 24
      %v515 = vpop.permute.xlu0 %514
      %516 = vrot.lane.b32.xlu0 %v388, 24
      %v517 = vpop.permute.xlu0 %516
      %534 = vrot.lane.b32.xlu0 %v389, 32
      %v535 = vpop.permute.xlu0 %534
      %536 = vrot.lane.b32.xlu0 %v390, 32
      %v537 = vpop.permute.xlu0 %536
      %538 = vrot.lane.b32.xlu0 %v391, 32
      %v539 = vpop.permute.xlu0 %538
      %540 = vrot.lane.b32.xlu0 %v392, 32
      %v541 = vpop.permute.xlu0 %540
      %542 = vrot.lane.b32.xlu0 %v393, 32
      %v543 = vpop.permute.xlu0 %542
      %544 = vrot.lane.b32.xlu0 %v394, 32
      %v545 = vpop.permute.xlu0 %544
      %546 = vrot.lane.b32.xlu0 %v395, 32
      %v547 = vpop.permute.xlu0 %546
      %548 = vrot.lane.b32.xlu0 %v396, 32
      %v549 = vpop.permute.xlu0 %548
      %566 = vrot.lane.b32.xlu0 %v397, 40
      %v567 = vpop.permute.xlu0 %566
      %568 = vrot.lane.b32.xlu0 %v398, 40
      %v569 = vpop.permute.xlu0 %568
      %570 = vrot.lane.b32.xlu0 %v399, 40
      %v571 = vpop.permute.xlu0 %570
      %572 = vrot.lane.b32.xlu0 %v400, 40
      %v573 = vpop.permute.xlu0 %572
      %574 = vrot.lane.b32.xlu0 %v401, 40
      %v575 = vpop.permute.xlu0 %574
      %576 = vrot.lane.b32.xlu0 %v402, 40
      %v577 = vpop.permute.xlu0 %576
      %578 = vrot.lane.b32.xlu0 %v403, 40
      %v579 = vpop.permute.xlu0 %578
      %580 = vrot.lane.b32.xlu0 %v404, 40
      %v581 = vpop.permute.xlu0 %580
      %598 = vrot.lane.b32.xlu0 %v406, 48
      %v599 = vpop.permute.xlu0 %598
      %600 = vrot.lane.b32.xlu0 %v407, 48
      %v601 = vpop.permute.xlu0 %600
      %602 = vrot.lane.b32.xlu0 %v408, 48
      %v603 = vpop.permute.xlu0 %602
      %604 = vrot.lane.b32.xlu0 %v409, 48
      %v605 = vpop.permute.xlu0 %604
      %606 = vrot.lane.b32.xlu0 %v410, 48
      %v607 = vpop.permute.xlu0 %606
      %608 = vrot.lane.b32.xlu0 %v411, 48
      %v609 = vpop.permute.xlu0 %608
      %610 = vrot.lane.b32.xlu0 %v412, 48
      %v611 = vpop.permute.xlu0 %610
      %612 = vrot.lane.b32.xlu0 %v413, 48
      %v613 = vpop.permute.xlu0 %612
      %630 = vrot.lane.b32.xlu0 %v414, 56
      %v631 = vpop.permute.xlu0 %630
      %632 = vrot.lane.b32.xlu0 %v415, 56
      %v633 = vpop.permute.xlu0 %632
      %634 = vrot.lane.b32.xlu0 %v416, 56
      %v635 = vpop.permute.xlu0 %634
      %636 = vrot.lane.b32.xlu0 %v417, 56
      %v637 = vpop.permute.xlu0 %636
      %638 = vrot.lane.b32.xlu0 %v418, 56
      %v639 = vpop.permute.xlu0 %638
      %640 = vrot.lane.b32.xlu0 %v419, 56
      %v641 = vpop.permute.xlu0 %640
      %642 = vrot.lane.b32.xlu0 %v420, 56
      %v643 = vpop.permute.xlu0 %642
      %644 = vrot.lane.b32.xlu0 %v421, 56
      %v645 = vpop.permute.xlu0 %644
      %662 = vrot.lane.b32.xlu0 %v422, 64
      %v663 = vpop.permute.xlu0 %662
      %664 = vrot.lane.b32.xlu0 %v423, 64
      %v665 = vpop.permute.xlu0 %664
      %666 = vrot.lane.b32.xlu0 %v424, 64
      %v667 = vpop.permute.xlu0 %666
      %668 = vrot.lane.b32.xlu0 %v425, 64
      %v669 = vpop.permute.xlu0 %668
      %670 = vrot.lane.b32.xlu0 %v426, 64
      %v671 = vpop.permute.xlu0 %670
      %672 = vrot.lane.b32.xlu0 %v427, 64
      %v673 = vpop.permute.xlu0 %672
      %674 = vrot.lane.b32.xlu0 %v428, 64
      %v675 = vpop.permute.xlu0 %674
      %676 = vrot.lane.b32.xlu0 %v429, 64
      %v677 = vpop.permute.xlu0 %676
      %v686 = vsel %vm326, %v357, %v439
      %v687 = vsel %vm326, %v358, %v441
      %v688 = vsel %vm326, %v359, %v443
      %v689 = vsel %vm326, %v360, %v445
      %v690 = vsel %vm326, %v361, %v447
      %v691 = vsel %vm326, %v362, %v449
      %v692 = vsel %vm326, %v363, %v451
      %v693 = vsel %vm326, %v364, %v453
      %vm694 = vcmask 130048
      %v695 = vsel %vm694, %v686, %v471
      %v696 = vsel %vm694, %v687, %v473
      %v697 = vsel %vm694, %v688, %v475
      %v698 = vsel %vm694, %v689, %v477
      %v699 = vsel %vm694, %v690, %v479
      %v700 = vsel %vm694, %v691, %v481
      %v701 = vsel %vm694, %v692, %v483
      %v702 = vsel %vm694, %v693, %v485
      %vm703 = vcmask 195584
      %v704 = vsel %vm703, %v695, %v503
      %v705 = vsel %vm703, %v696, %v505
      %v706 = vsel %vm703, %v697, %v507
      %v707 = vsel %vm703, %v698, %v509
      %v708 = vsel %vm703, %v699, %v511
      %v709 = vsel %vm703, %v700, %v513
      %v710 = vsel %vm703, %v701, %v515
      %v711 = vsel %vm703, %v702, %v517
      %vm712 = vcmask 261120
      %v713 = vsel %vm712, %v704, %v535
      %v714 = vsel %vm712, %v705, %v537
      %v715 = vsel %vm712, %v706, %v539
      %v716 = vsel %vm712, %v707, %v541
      %v717 = vsel %vm712, %v708, %v543
      %v718 = vsel %vm712, %v709, %v545
      %v719 = vsel %vm712, %v710, %v547
      %v720 = vsel %vm712, %v711, %v549
      %vm721 = vcmask 326656
      %v722 = vsel %vm721, %v713, %v567
      %v723 = vsel %vm721, %v714, %v569
      %v724 = vsel %vm721, %v715, %v571
      %v725 = vsel %vm721, %v716, %v573
      %v726 = vsel %vm721, %v717, %v575
      %v727 = vsel %vm721, %v718, %v577
      %v728 = vsel %vm721, %v719, %v579
      %v729 = vsel %vm721, %v720, %v581
      %vm730 = vcmask 392192
      %v731 = vsel %vm730, %v722, %v599
      %v732 = vsel %vm730, %v723, %v601
      %v733 = vsel %vm730, %v724, %v603
      %v734 = vsel %vm730, %v725, %v605
      %v735 = vsel %vm730, %v726, %v607
      %v736 = vsel %vm730, %v727, %v609
      %v737 = vsel %vm730, %v728, %v611
      %v738 = vsel %vm730, %v729, %v613
      %vm739 = vcmask 457728
      %v740 = vsel %vm739, %v731, %v631
      %v741 = vsel %vm739, %v732, %v633
      %v742 = vsel %vm739, %v733, %v635
      %v743 = vsel %vm739, %v734, %v637
      %v744 = vsel %vm739, %v735, %v639
      %v745 = vsel %vm739, %v736, %v641
      %v746 = vsel %vm739, %v737, %v643
      %v747 = vsel %vm739, %v738, %v645
      %vm748 = vcmask 523264
      %v749 = vsel %vm748, %v740, %v663
      %v750 = vsel %vm748, %v741, %v665
      %v751 = vsel %vm748, %v742, %v667
      %v752 = vsel %vm748, %v743, %v669
      %v753 = vsel %vm748, %v744, %v671
      %v754 = vsel %vm748, %v745, %v673
      %v755 = vsel %vm748, %v746, %v675
      %v756 = vsel %vm748, %v747, %v677
      %v757 = vpack.c.bf16 %v750, %v749
      %v758 = vpack.c.bf16 %v752, %v751
      %v759 = vpack.c.bf16 %v754, %v753
      %v760 = vpack.c.bf16 %v756, %v755
      %v761 = vld [vmem:[%s3] sm:$0xf]
      %v762 = vld [vmem:[%s3 + $0x4] sm:$0xf]
      %v763 = vld [vmem:[%s3 + $0x8] sm:$0xf]
      %v764 = vld [vmem:[%s3 + $0xc] sm:$0xf]
      %v765 = vld [vmem:[%s3 + $0x10] sm:$0xf]
      %v766 = vld [vmem:[%s3 + $0x14] sm:$0xf]
      %v767 = vld [vmem:[%s3 + $0x18] sm:$0xf]
      %v768 = vld [vmem:[%s3 + $0x1c] sm:$0xf]
      %v769 = vld [vmem:[%s3 + $0x20] sm:$0xf]
      %v779 = vunpack.c.l.b16 %v761
      %v780 = vunpack.c.l.b16 %v762
      %v781 = vunpack.c.l.b16 %v763
      %v782 = vunpack.c.l.b16 %v764
      %v783 = vunpack.c.l.b16 %v765
      %v784 = vunpack.c.l.b16 %v766
      %v785 = vunpack.c.l.b16 %v767
      %v786 = vunpack.c.l.b16 %v768
      %v787 = vunpack.c.l.b16 %v769
      %v788 = vpack.c.b16 %v780, %v779
      %v789 = vpack.c.b16 %v782, %v781
      %v790 = vpack.c.b16 %v784, %v783
      %v791 = vpack.c.b16 %v786, %v785
      %v792 = vpack.c.b16 %v787, %v787
      %vm797 = vcmask 588800
      %v799 = vsel %vm797, %v757, 0
      %v802 = vsel %vm797, %v758, 0
      %v805 = vsel %vm797, %v759, 0
      %v808 = vsel %vm797, %v760, 0
      %vm810 = vcmask 1043456
      %v812 = vsel %vm810, %v792, 0
      %814 = vmatprep.subr.bf16.mxu0 0
      %815 = vmatpush1.bf16.msra.mxu0 %v788
      %816 = vmatprep.subr.bf16.mxu0 0
      %817 = vmatpush1.bf16.msra.mxu0 %v789
      %818 = vmatprep.subr.bf16.mxu0 0
      %819 = vmatpush1.bf16.msra.mxu0 %v790
      %820 = vmatprep.subr.bf16.mxu0 0
      %821 = vmatpush1.bf16.msra.mxu0 %v791
      %822 = vmatprep.subr.bf16.mxu0 0
      %823 = vmatpush1.bf16.msra.mxu0 %v812
      %824 = vmatprep.subr.bf16.mxu0 0
      %825 = vmatpush1.bf16.msra.mxu0 0
      %826 = vmatprep.subr.bf16.mxu0 0
      %827 = vmatpush1.bf16.msra.mxu0 0
      %828 = vmatprep.subr.bf16.mxu0 0
      %829 = vmatpush1.bf16.msra.mxu0 0
      %830 = vmatprep.subr.bf16.mxu0 0
      %831 = vmatpush1.bf16.msra.mxu0 0
      %832 = vmatprep.subr.bf16.mxu0 0
      %833 = vmatpush1.bf16.msra.mxu0 0
      %834 = vmatprep.subr.bf16.mxu0 0
      %835 = vmatpush1.bf16.msra.mxu0 0
      %836 = vmatprep.subr.bf16.mxu0 0
      %837 = vmatpush1.bf16.msra.mxu0 0
      %838 = vmatprep.subr.bf16.mxu0 0
      %839 = vmatpush1.bf16.msra.mxu0 0
      %840 = vmatprep.subr.bf16.mxu0 0
      %841 = vmatpush1.bf16.msra.mxu0 0
      %842 = vmatprep.subr.bf16.mxu0 0
      %843 = vmatpush1.bf16.msra.mxu0 0
      %844 = vmatprep.subr.bf16.mxu0 0
      %845 = vmatpush1.bf16.msra.mxu0 0
      %846 = vmatprep.mubr.bf16.mxu0 0
      %847 = vmatmul.mubr.bf16.gmra.mrb[0].mxu0 %v799
      %v848 = vpop.f32.mrb[0].mxu0
      %v849 = vadd.f32 0.0, %v848
      %v850 = vpop.f32.mrb[0].mxu0
      %v851 = vpop.f32.mrb[0].mxu0
      %v852 = vadd.f32 0.0, %v851
      %v853 = vpop.f32.mrb[0].mxu0
      %854 = vmatprep.mubr.bf16.mxu0 0
      %855 = vmatmul.mubr.bf16.gmra.mrb[0].mxu0 %v802
      %v856 = vpop.f32.mrb[0].mxu0
      %v857 = vadd.f32 0.0, %v856
      %v858 = vpop.f32.mrb[0].mxu0
      %v859 = vpop.f32.mrb[0].mxu0
      %v860 = vadd.f32 0.0, %v859
      %v861 = vpop.f32.mrb[0].mxu0
      %862 = vmatprep.mubr.bf16.mxu0 0
      %863 = vmatmul.mubr.bf16.gmra.mrb[0].mxu0 %v805
      %v864 = vpop.f32.mrb[0].mxu0
      %v865 = vadd.f32 0.0, %v864
      %v866 = vpop.f32.mrb[0].mxu0
      %v867 = vpop.f32.mrb[0].mxu0
      %v868 = vadd.f32 0.0, %v867
      %v869 = vpop.f32.mrb[0].mxu0
      %870 = vmatprep.mubr.bf16.mxu0 0
      %871 = vmatmul.mubr.bf16.gmra.mrb[0].mxu0 %v808
      %v872 = vpop.f32.mrb[0].mxu0
      %v873 = vadd.f32 0.0, %v872
      %v874 = vpop.f32.mrb[0].mxu0
      %v875 = vpop.f32.mrb[0].mxu0
      %v876 = vadd.f32 0.0, %v875
      %v877 = vpop.f32.mrb[0].mxu0
      %878 = vdwg.mxu0
      %v879 = vld [vmem:[%s4] sm:$0x1]
      %v880 = vld [vmem:[%s5] sm:$0x1]
      %v882 = vlaneseq
      %v883 = vshrl.u32 %v882, 7
      %v884 = vsub.s32 0, %v883
      %v885 = vrot.slane %v879, %v884
      %v887 = vmul.f32 %v849, %v885
      %v888 = vmul.f32 %v852, %v885
      %v889 = vmul.f32 %v857, %v885
      %v890 = vmul.f32 %v860, %v885
      %v891 = vmul.f32 %v865, %v885
      %v892 = vmul.f32 %v868, %v885
      %v893 = vmul.f32 %v873, %v885
      %v894 = vmul.f32 %v876, %v885
      %v896 = vlaneseq
      %v897 = vshrl.u32 %v896, 7
      %v898 = vsub.s32 0, %v897
      %v899 = vrot.slane %v880, %v898
      %v901 = vadd.f32 %v887, %v899
      %v902 = vadd.f32 %v888, %v899
      %v903 = vadd.f32 %v889, %v899
      %v904 = vadd.f32 %v890, %v899
      %v905 = vadd.f32 %v891, %v899
      %v906 = vadd.f32 %v892, %v899
      %v907 = vadd.f32 %v893, %v899
      %v908 = vadd.f32 %v894, %v899
      %v909 = vmax.f32 %v901, 0.0
      %v910 = vmax.f32 %v902, 0.0
      %v911 = vmax.f32 %v903, 0.0
      %v912 = vmax.f32 %v904, 0.0
      %v913 = vmax.f32 %v905, 0.0
      %v914 = vmax.f32 %v906, 0.0
      %v915 = vmax.f32 %v907, 0.0
      %v916 = vmax.f32 %v908, 0.0
      %917 = vst.msk [vmem:[#allocation3] sm:$0xff] %vm326, 0.0
      %918 = vst.msk [vmem:[#allocation3 + $0x8] sm:$0x3] %vm328, 0.0
      %919 = vst.msk [vmem:[#allocation3 + $0x10] sm:$0xff] %vm326, 0.0
      %920 = vst.msk [vmem:[#allocation3 + $0x18] sm:$0x3] %vm328, 0.0
      %921 = vst.msk [vmem:[#allocation3 + $0x20] sm:$0xff] %vm326, 0.0
      %922 = vst.msk [vmem:[#allocation3 + $0x28] sm:$0x3] %vm328, 0.0
      %923 = vst.msk [vmem:[#allocation3 + $0x30] sm:$0xff] %vm326, 0.0
      %924 = vst.msk [vmem:[#allocation3 + $0x38] sm:$0x3] %vm328, 0.0
      %925 = vst.msk [vmem:[#allocation3 + $0x40] sm:$0xff] %vm326, 0.0
      %926 = vst.msk [vmem:[#allocation3 + $0x48] sm:$0x3] %vm328, 0.0
      %927 = vst.msk [vmem:[#allocation3 + $0x50] sm:$0xff] %vm326, 0.0
      %928 = vst.msk [vmem:[#allocation3 + $0x58] sm:$0x3] %vm328, 0.0
      %929 = vst.msk [vmem:[#allocation3 + $0x60] sm:$0xff] %vm326, 0.0
      %930 = vst.msk [vmem:[#allocation3 + $0x68] sm:$0x3] %vm328, 0.0
      %931 = vst.msk [vmem:[#allocation3 + $0x70] sm:$0xff] %vm326, 0.0
      %932 = vst.msk [vmem:[#allocation3 + $0x78] sm:$0x3] %vm328, 0.0
      %933 = vst.msk [vmem:[#allocation3 + $0x80] sm:$0xff] %vm326, 0.0
      %934 = vst.msk [vmem:[#allocation3 + $0x88] sm:$0x3] %vm328, 0.0
      %935 = vst.msk [vmem:[#allocation3 + $0x90] sm:$0xff] %vm326, 0.0
      %936 = vst.msk [vmem:[#allocation3 + $0x98] sm:$0x3] %vm328, 0.0
      %s937 = scalar_lea.vmem [#allocation3], 16
      %938 = vst.msk [vmem:[%s937 + $0x1] sm:$0xff] %vm326, %v909
      %939 = vst.msk [vmem:[%s937 + $0x11] sm:$0xff] %vm326, %v910
      %940 = vst.msk [vmem:[%s937 + $0x21] sm:$0xff] %vm326, %v911
      %941 = vst.msk [vmem:[%s937 + $0x31] sm:$0xff] %vm326, %v912
      %942 = vst.msk [vmem:[%s937 + $0x41] sm:$0xff] %vm326, %v913
      %943 = vst.msk [vmem:[%s937 + $0x51] sm:$0xff] %vm326, %v914
      %944 = vst.msk [vmem:[%s937 + $0x61] sm:$0xff] %vm326, %v915
      %945 = vst.msk [vmem:[%s937 + $0x71] sm:$0xff] %vm326, %v916
      %v946 = vld [vmem:[#allocation3] sm:$0xff]
      %v947 = vld [vmem:[#allocation3 + $0x10] sm:$0xff]
      %v948 = vld [vmem:[#allocation3 + $0x20] sm:$0xff]
      %v949 = vld [vmem:[#allocation3 + $0x30] sm:$0xff]
      %v950 = vld [vmem:[#allocation3 + $0x40] sm:$0xff]
      %v951 = vld [vmem:[#allocation3 + $0x50] sm:$0xff]
      %v952 = vld [vmem:[#allocation3 + $0x60] sm:$0xff]
      %v953 = vld [vmem:[#allocation3 + $0x70] sm:$0xff]
      %v954 = vld [vmem:[#allocation3 + $0x1] sm:$0xff]
      %v955 = vld [vmem:[#allocation3 + $0x11] sm:$0xff]
      %v956 = vld [vmem:[#allocation3 + $0x21] sm:$0xff]
      %v957 = vld [vmem:[#allocation3 + $0x31] sm:$0xff]
      %v958 = vld [vmem:[#allocation3 + $0x41] sm:$0xff]
      %v959 = vld [vmem:[#allocation3 + $0x51] sm:$0xff]
      %v960 = vld [vmem:[#allocation3 + $0x61] sm:$0xff]
      %v961 = vld [vmem:[#allocation3 + $0x71] sm:$0xff]
      %v962 = vld [vmem:[#allocation3 + $0x2] sm:$0xff]
      %v963 = vld [vmem:[#allocation3 + $0x12] sm:$0xff]
      %v964 = vld [vmem:[#allocation3 + $0x22] sm:$0xff]
      %v965 = vld [vmem:[#allocation3 + $0x32] sm:$0xff]
      %v966 = vld [vmem:[#allocation3 + $0x42] sm:$0xff]
      %v967 = vld [vmem:[#allocation3 + $0x52] sm:$0xff]
      %v968 = vld [vmem:[#allocation3 + $0x62] sm:$0xff]
      %v969 = vld [vmem:[#allocation3 + $0x72] sm:$0xff]
      %v970 = vld [vmem:[%s937] sm:$0xff]
      %v971 = vld [vmem:[%s937 + $0x10] sm:$0xff]
      %v972 = vld [vmem:[%s937 + $0x20] sm:$0xff]
      %v973 = vld [vmem:[%s937 + $0x30] sm:$0xff]
      %v974 = vld [vmem:[%s937 + $0x40] sm:$0xff]
      %v975 = vld [vmem:[%s937 + $0x50] sm:$0xff]
      %v976 = vld [vmem:[%s937 + $0x60] sm:$0xff]
      %v977 = vld [vmem:[%s937 + $0x70] sm:$0xff]
      %v978 = vld [vmem:[%s937 + $0x1] sm:$0xff]
      %v979 = vld [vmem:[%s937 + $0x11] sm:$0xff]
      %v980 = vld [vmem:[%s937 + $0x21] sm:$0xff]
      %v981 = vld [vmem:[%s937 + $0x31] sm:$0xff]
      %v982 = vld [vmem:[%s937 + $0x41] sm:$0xff]
      %v983 = vld [vmem:[%s937 + $0x51] sm:$0xff]
      %v984 = vld [vmem:[%s937 + $0x61] sm:$0xff]
      %v985 = vld [vmem:[%s937 + $0x71] sm:$0xff]
      %v986 = vld [vmem:[%s937 + $0x2] sm:$0xff]
      %v987 = vld [vmem:[%s937 + $0x12] sm:$0xff]
      %v988 = vld [vmem:[%s937 + $0x22] sm:$0xff]
      %v989 = vld [vmem:[%s937 + $0x32] sm:$0xff]
      %v990 = vld [vmem:[%s937 + $0x42] sm:$0xff]
      %v991 = vld [vmem:[%s937 + $0x52] sm:$0xff]
      %v992 = vld [vmem:[%s937 + $0x62] sm:$0xff]
      %v993 = vld [vmem:[%s937 + $0x72] sm:$0xff]
      %s994 = scalar_lea.vmem [#allocation3], 32
      %v995 = vld [vmem:[%s994] sm:$0xff]
      %v996 = vld [vmem:[%s994 + $0x10] sm:$0xff]
      %v997 = vld [vmem:[%s994 + $0x20] sm:$0xff]
      %v998 = vld [vmem:[%s994 + $0x30] sm:$0xff]
      %v999 = vld [vmem:[%s994 + $0x40] sm:$0xff]
      %v1000 = vld [vmem:[%s994 + $0x50] sm:$0xff]
      %v1001 = vld [vmem:[%s994 + $0x60] sm:$0xff]
      %v1002 = vld [vmem:[%s994 + $0x70] sm:$0xff]
      %v1003 = vld [vmem:[%s994 + $0x1] sm:$0xff]
      %v1004 = vld [vmem:[%s994 + $0x11] sm:$0xff]
      %v1005 = vld [vmem:[%s994 + $0x21] sm:$0xff]
      %v1006 = vld [vmem:[%s994 + $0x31] sm:$0xff]
      %v1007 = vld [vmem:[%s994 + $0x41] sm:$0xff]
      %v1008 = vld [vmem:[%s994 + $0x51] sm:$0xff]
      %v1009 = vld [vmem:[%s994 + $0x61] sm:$0xff]
      %v1010 = vld [vmem:[%s994 + $0x71] sm:$0xff]
      %v1011 = vld [vmem:[%s994 + $0x2] sm:$0xff]
      %v1012 = vld [vmem:[%s994 + $0x12] sm:$0xff]
      %v1013 = vld [vmem:[%s994 + $0x22] sm:$0xff]
      %v1014 = vld [vmem:[%s994 + $0x32] sm:$0xff]
      %v1015 = vld [vmem:[%s994 + $0x42] sm:$0xff]
      %v1016 = vld [vmem:[%s994 + $0x52] sm:$0xff]
      %v1017 = vld [vmem:[%s994 + $0x62] sm:$0xff]
      %v1018 = vld [vmem:[%s994 + $0x72] sm:$0xff]
      %1027 = vrot.lane.b32.xlu0 %v954, 8
      %v1028 = vpop.permute.xlu0 %1027
      %1029 = vrot.lane.b32.xlu0 %v955, 8
      %v1030 = vpop.permute.xlu0 %1029
      %1031 = vrot.lane.b32.xlu0 %v956, 8
      %v1032 = vpop.permute.xlu0 %1031
      %1033 = vrot.lane.b32.xlu0 %v957, 8
      %v1034 = vpop.permute.xlu0 %1033
      %1035 = vrot.lane.b32.xlu0 %v958, 8
      %v1036 = vpop.permute.xlu0 %1035
      %1037 = vrot.lane.b32.xlu0 %v959, 8
      %v1038 = vpop.permute.xlu0 %1037
      %1039 = vrot.lane.b32.xlu0 %v960, 8
      %v1040 = vpop.permute.xlu0 %1039
      %1041 = vrot.lane.b32.xlu0 %v961, 8
      %v1042 = vpop.permute.xlu0 %1041
      %1059 = vrot.lane.b32.xlu0 %v962, 16
      %v1060 = vpop.permute.xlu0 %1059
      %1061 = vrot.lane.b32.xlu0 %v963, 16
      %v1062 = vpop.permute.xlu0 %1061
      %1063 = vrot.lane.b32.xlu0 %v964, 16
      %v1064 = vpop.permute.xlu0 %1063
      %1065 = vrot.lane.b32.xlu0 %v965, 16
      %v1066 = vpop.permute.xlu0 %1065
      %1067 = vrot.lane.b32.xlu0 %v966, 16
      %v1068 = vpop.permute.xlu0 %1067
      %1069 = vrot.lane.b32.xlu0 %v967, 16
      %v1070 = vpop.permute.xlu0 %1069
      %1071 = vrot.lane.b32.xlu0 %v968, 16
      %v1072 = vpop.permute.xlu0 %1071
      %1073 = vrot.lane.b32.xlu0 %v969, 16
      %v1074 = vpop.permute.xlu0 %1073
      %1091 = vrot.lane.b32.xlu0 %v970, 24
      %v1092 = vpop.permute.xlu0 %1091
      %1093 = vrot.lane.b32.xlu0 %v971, 24
      %v1094 = vpop.permute.xlu0 %1093
      %1095 = vrot.lane.b32.xlu0 %v972, 24
      %v1096 = vpop.permute.xlu0 %1095
      %1097 = vrot.lane.b32.xlu0 %v973, 24
      %v1098 = vpop.permute.xlu0 %1097
      %1099 = vrot.lane.b32.xlu0 %v974, 24
      %v1100 = vpop.permute.xlu0 %1099
      %1101 = vrot.lane.b32.xlu0 %v975, 24
      %v1102 = vpop.permute.xlu0 %1101
      %1103 = vrot.lane.b32.xlu0 %v976, 24
      %v1104 = vpop.permute.xlu0 %1103
      %1105 = vrot.lane.b32.xlu0 %v977, 24
      %v1106 = vpop.permute.xlu0 %1105
      %1123 = vrot.lane.b32.xlu0 %v978, 32
      %v1124 = vpop.permute.xlu0 %1123
      %1125 = vrot.lane.b32.xlu0 %v979, 32
      %v1126 = vpop.permute.xlu0 %1125
      %1127 = vrot.lane.b32.xlu0 %v980, 32
      %v1128 = vpop.permute.xlu0 %1127
      %1129 = vrot.lane.b32.xlu0 %v981, 32
      %v1130 = vpop.permute.xlu0 %1129
      %1131 = vrot.lane.b32.xlu0 %v982, 32
      %v1132 = vpop.permute.xlu0 %1131
      %1133 = vrot.lane.b32.xlu0 %v983, 32
      %v1134 = vpop.permute.xlu0 %1133
      %1135 = vrot.lane.b32.xlu0 %v984, 32
      %v1136 = vpop.permute.xlu0 %1135
      %1137 = vrot.lane.b32.xlu0 %v985, 32
      %v1138 = vpop.permute.xlu0 %1137
      %1155 = vrot.lane.b32.xlu0 %v986, 40
      %v1156 = vpop.permute.xlu0 %1155
      %1157 = vrot.lane.b32.xlu0 %v987, 40
      %v1158 = vpop.permute.xlu0 %1157
      %1159 = vrot.lane.b32.xlu0 %v988, 40
      %v1160 = vpop.permute.xlu0 %1159
      %1161 = vrot.lane.b32.xlu0 %v989, 40
      %v1162 = vpop.permute.xlu0 %1161
      %1163 = vrot.lane.b32.xlu0 %v990, 40
      %v1164 = vpop.permute.xlu0 %1163
      %1165 = vrot.lane.b32.xlu0 %v991, 40
      %v1166 = vpop.permute.xlu0 %1165
      %1167 = vrot.lane.b32.xlu0 %v992, 40
      %v1168 = vpop.permute.xlu0 %1167
      %1169 = vrot.lane.b32.xlu0 %v993, 40
      %v1170 = vpop.permute.xlu0 %1169
      %1187 = vrot.lane.b32.xlu0 %v995, 48
      %v1188 = vpop.permute.xlu0 %1187
      %1189 = vrot.lane.b32.xlu0 %v996, 48
      %v1190 = vpop.permute.xlu0 %1189
      %1191 = vrot.lane.b32.xlu0 %v997, 48
      %v1192 = vpop.permute.xlu0 %1191
      %1193 = vrot.lane.b32.xlu0 %v998, 48
      %v1194 = vpop.permute.xlu0 %1193
      %1195 = vrot.lane.b32.xlu0 %v999, 48
      %v1196 = vpop.permute.xlu0 %1195
      %1197 = vrot.lane.b32.xlu0 %v1000, 48
      %v1198 = vpop.permute.xlu0 %1197
      %1199 = vrot.lane.b32.xlu0 %v1001, 48
      %v1200 = vpop.permute.xlu0 %1199
      %1201 = vrot.lane.b32.xlu0 %v1002, 48
      %v1202 = vpop.permute.xlu0 %1201
      %1219 = vrot.lane.b32.xlu0 %v1003, 56
      %v1220 = vpop.permute.xlu0 %1219
      %1221 = vrot.lane.b32.xlu0 %v1004, 56
      %v1222 = vpop.permute.xlu0 %1221
      %1223 = vrot.lane.b32.xlu0 %v1005, 56
      %v1224 = vpop.permute.xlu0 %1223
      %1225 = vrot.lane.b32.xlu0 %v1006, 56
      %v1226 = vpop.permute.xlu0 %1225
      %1227 = vrot.lane.b32.xlu0 %v1007, 56
      %v1228 = vpop.permute.xlu0 %1227
      %1229 = vrot.lane.b32.xlu0 %v1008, 56
      %v1230 = vpop.permute.xlu0 %1229
      %1231 = vrot.lane.b32.xlu0 %v1009, 56
      %v1232 = vpop.permute.xlu0 %1231
      %1233 = vrot.lane.b32.xlu0 %v1010, 56
      %v1234 = vpop.permute.xlu0 %1233
      %1251 = vrot.lane.b32.xlu0 %v1011, 64
      %v1252 = vpop.permute.xlu0 %1251
      %1253 = vrot.lane.b32.xlu0 %v1012, 64
      %v1254 = vpop.permute.xlu0 %1253
      %1255 = vrot.lane.b32.xlu0 %v1013, 64
      %v1256 = vpop.permute.xlu0 %1255
      %1257 = vrot.lane.b32.xlu0 %v1014, 64
      %v1258 = vpop.permute.xlu0 %1257
      %1259 = vrot.lane.b32.xlu0 %v1015, 64
      %v1260 = vpop.permute.xlu0 %1259
      %1261 = vrot.lane.b32.xlu0 %v1016, 64
      %v1262 = vpop.permute.xlu0 %1261
      %1263 = vrot.lane.b32.xlu0 %v1017, 64
      %v1264 = vpop.permute.xlu0 %1263
      %1265 = vrot.lane.b32.xlu0 %v1018, 64
      %v1266 = vpop.permute.xlu0 %1265
      %v1275 = vsel %vm326, %v946, %v1028
      %v1276 = vsel %vm326, %v947, %v1030
      %v1277 = vsel %vm326, %v948, %v1032
      %v1278 = vsel %vm326, %v949, %v1034
      %v1279 = vsel %vm326, %v950, %v1036
      %v1280 = vsel %vm326, %v951, %v1038
      %v1281 = vsel %vm326, %v952, %v1040
      %v1282 = vsel %vm326, %v953, %v1042
      %v1283 = vsel %vm694, %v1275, %v1060
      %v1284 = vsel %vm694, %v1276, %v1062
      %v1285 = vsel %vm694, %v1277, %v1064
      %v1286 = vsel %vm694, %v1278, %v1066
      %v1287 = vsel %vm694, %v1279, %v1068
      %v1288 = vsel %vm694, %v1280, %v1070
      %v1289 = vsel %vm694, %v1281, %v1072
      %v1290 = vsel %vm694, %v1282, %v1074
      %v1291 = vsel %vm703, %v1283, %v1092
      %v1292 = vsel %vm703, %v1284, %v1094
      %v1293 = vsel %vm703, %v1285, %v1096
      %v1294 = vsel %vm703, %v1286, %v1098
      %v1295 = vsel %vm703, %v1287, %v1100
      %v1296 = vsel %vm703, %v1288, %v1102
      %v1297 = vsel %vm703, %v1289, %v1104
      %v1298 = vsel %vm703, %v1290, %v1106
      %v1299 = vsel %vm712, %v1291, %v1124
      %v1300 = vsel %vm712, %v1292, %v1126
      %v1301 = vsel %vm712, %v1293, %v1128
      %v1302 = vsel %vm712, %v1294, %v1130
      %v1303 = vsel %vm712, %v1295, %v1132
      %v1304 = vsel %vm712, %v1296, %v1134
      %v1305 = vsel %vm712, %v1297, %v1136
      %v1306 = vsel %vm712, %v1298, %v1138
      %v1307 = vsel %vm721, %v1299, %v1156
      %v1308 = vsel %vm721, %v1300, %v1158
      %v1309 = vsel %vm721, %v1301, %v1160
      %v1310 = vsel %vm721, %v1302, %v1162
      %v1311 = vsel %vm721, %v1303, %v1164
      %v1312 = vsel %vm721, %v1304, %v1166
      %v1313 = vsel %vm721, %v1305, %v1168
      %v1314 = vsel %vm721, %v1306, %v1170
      %v1315 = vsel %vm730, %v1307, %v1188
      %v1316 = vsel %vm730, %v1308, %v1190
      %v1317 = vsel %vm730, %v1309, %v1192
      %v1318 = vsel %vm730, %v1310, %v1194
      %v1319 = vsel %vm730, %v1311, %v1196
      %v1320 = vsel %vm730, %v1312, %v1198
      %v1321 = vsel %vm730, %v1313, %v1200
      %v1322 = vsel %vm730, %v1314, %v1202
      %v1323 = vsel %vm739, %v1315, %v1220
      %v1324 = vsel %vm739, %v1316, %v1222
      %v1325 = vsel %vm739, %v1317, %v1224
      %v1326 = vsel %vm739, %v1318, %v1226
      %v1327 = vsel %vm739, %v1319, %v1228
      %v1328 = vsel %vm739, %v1320, %v1230
      %v1329 = vsel %vm739, %v1321, %v1232
      %v1330 = vsel %vm739, %v1322, %v1234
      %v1331 = vsel %vm748, %v1323, %v1252
      %v1332 = vsel %vm748, %v1324, %v1254
      %v1333 = vsel %vm748, %v1325, %v1256
      %v1334 = vsel %vm748, %v1326, %v1258
      %v1335 = vsel %vm748, %v1327, %v1260
      %v1336 = vsel %vm748, %v1328, %v1262
      %v1337 = vsel %vm748, %v1329, %v1264
      %v1338 = vsel %vm748, %v1330, %v1266
      %v1339 = vpack.c.bf16 %v1332, %v1331
      %v1340 = vpack.c.bf16 %v1334, %v1333
      %v1341 = vpack.c.bf16 %v1336, %v1335
      %v1342 = vpack.c.bf16 %v1338, %v1337
      %v1343 = vld [vmem:[%s6] sm:$0xf]
      %v1344 = vld [vmem:[%s6 + $0x4] sm:$0xf]
      %v1345 = vld [vmem:[%s6 + $0x8] sm:$0xf]
      %v1346 = vld [vmem:[%s6 + $0xc] sm:$0xf]
      %v1347 = vld [vmem:[%s6 + $0x10] sm:$0xf]
      %v1348 = vld [vmem:[%s6 + $0x14] sm:$0xf]
      %v1349 = vld [vmem:[%s6 + $0x18] sm:$0xf]
      %v1350 = vld [vmem:[%s6 + $0x1c] sm:$0xf]
      %v1351 = vld [vmem:[%s6 + $0x20] sm:$0xf]
      %v1361 = vunpack.c.l.b16 %v1343
      %v1362 = vunpack.c.l.b16 %v1344
      %v1363 = vunpack.c.l.b16 %v1345
      %v1364 = vunpack.c.l.b16 %v1346
      %v1365 = vunpack.c.l.b16 %v1347
      %v1366 = vunpack.c.l.b16 %v1348
      %v1367 = vunpack.c.l.b16 %v1349
      %v1368 = vunpack.c.l.b16 %v1350
      %v1369 = vunpack.c.l.b16 %v1351
      %v1370 = vpack.c.b16 %v1362, %v1361
      %v1371 = vpack.c.b16 %v1364, %v1363
      %v1372 = vpack.c.b16 %v1366, %v1365
      %v1373 = vpack.c.b16 %v1368, %v1367
      %v1374 = vpack.c.b16 %v1369, %v1369
      %v1380 = vsel %vm797, %v1339, 0
      %v1383 = vsel %vm797, %v1340, 0
      %v1386 = vsel %vm797, %v1341, 0
      %v1389 = vsel %vm797, %v1342, 0
      %v1392 = vsel %vm810, %v1374, 0
      %1394 = vmatprep.subr.bf16.mxu0 0
      %1395 = vmatpush1.bf16.msra.mxu0 %v1370
      %1396 = vmatprep.subr.bf16.mxu0 0
      %1397 = vmatpush1.bf16.msra.mxu0 %v1371
      %1398 = vmatprep.subr.bf16.mxu0 0
      %1399 = vmatpush1.bf16.msra.mxu0 %v1372
      %1400 = vmatprep.subr.bf16.mxu0 0
      %1401 = vmatpush1.bf16.msra.mxu0 %v1373
      %1402 = vmatprep.subr.bf16.mxu0 0
      %1403 = vmatpush1.bf16.msra.mxu0 %v1392
      %1404 = vmatprep.subr.bf16.mxu0 0
      %1405 = vmatpush1.bf16.msra.mxu0 0
      %1406 = vmatprep.subr.bf16.mxu0 0
      %1407 = vmatpush1.bf16.msra.mxu0 0
      %1408 = vmatprep.subr.bf16.mxu0 0
      %1409 = vmatpush1.bf16.msra.mxu0 0
      %1410 = vmatprep.subr.bf16.mxu0 0
      %1411 = vmatpush1.bf16.msra.mxu0 0
      %1412 = vmatprep.subr.bf16.mxu0 0
      %1413 = vmatpush1.bf16.msra.mxu0 0
      %1414 = vmatprep.subr.bf16.mxu0 0
      %1415 = vmatpush1.bf16.msra.mxu0 0
      %1416 = vmatprep.subr.bf16.mxu0 0
      %1417 = vmatpush1.bf16.msra.mxu0 0
      %1418 = vmatprep.subr.bf16.mxu0 0
      %1419 = vmatpush1.bf16.msra.mxu0 0
      %1420 = vmatprep.subr.bf16.mxu0 0
      %1421 = vmatpush1.bf16.msra.mxu0 0
      %1422 = vmatprep.subr.bf16.mxu0 0
      %1423 = vmatpush1.bf16.msra.mxu0 0
      %1424 = vmatprep.subr.bf16.mxu0 0
      %1425 = vmatpush1.bf16.msra.mxu0 0
      %1426 = vmatprep.mubr.bf16.mxu0 0
      %1427 = vmatmul.mubr.bf16.gmra.mrb[0].mxu0 %v1380
      %v1428 = vpop.f32.mrb[0].mxu0
      %v1429 = vadd.f32 %v318, %v1428
      %v1430 = vpop.f32.mrb[0].mxu0
      %v1431 = vpop.f32.mrb[0].mxu0
      %v1432 = vadd.f32 %v319, %v1431
      %v1433 = vpop.f32.mrb[0].mxu0
      %1434 = vmatprep.mubr.bf16.mxu0 0
      %1435 = vmatmul.mubr.bf16.gmra.mrb[0].mxu0 %v1383
      %v1436 = vpop.f32.mrb[0].mxu0
      %v1437 = vadd.f32 %v320, %v1436
      %v1438 = vpop.f32.mrb[0].mxu0
      %v1439 = vpop.f32.mrb[0].mxu0
      %v1440 = vadd.f32 %v321, %v1439
      %v1441 = vpop.f32.mrb[0].mxu0
      %1442 = vmatprep.mubr.bf16.mxu0 0
      %1443 = vmatmul.mubr.bf16.gmra.mrb[0].mxu0 %v1386
      %v1444 = vpop.f32.mrb[0].mxu0
      %v1445 = vadd.f32 %v322, %v1444
      %v1446 = vpop.f32.mrb[0].mxu0
      %v1447 = vpop.f32.mrb[0].mxu0
      %v1448 = vadd.f32 %v323, %v1447
      %v1449 = vpop.f32.mrb[0].mxu0
      %1450 = vmatprep.mubr.bf16.mxu0 0
      %1451 = vmatmul.mubr.bf16.gmra.mrb[0].mxu0 %v1389
      %v1452 = vpop.f32.mrb[0].mxu0
      %v1453 = vadd.f32 %v324, %v1452
      %v1454 = vpop.f32.mrb[0].mxu0
      %v1455 = vpop.f32.mrb[0].mxu0
      %v1456 = vadd.f32 %v325, %v1455
      %v1457 = vpop.f32.mrb[0].mxu0
      %1458 = vdwg.mxu0
      %1459 = vst.msk [vmem:[%s278] sm:$0xff] %vm326, %v1429
      %1460 = vst.msk [vmem:[%s278 + $0x8] sm:$0xff] %vm326, %v1432
      %1461 = vst.msk [vmem:[%s278 + $0x10] sm:$0xff] %vm326, %v1437
      %1462 = vst.msk [vmem:[%s278 + $0x18] sm:$0xff] %vm326, %v1440
      %1463 = vst.msk [vmem:[%s278 + $0x20] sm:$0xff] %vm326, %v1445
      %1464 = vst.msk [vmem:[%s278 + $0x28] sm:$0xff] %vm326, %v1448
      %1465 = vst.msk [vmem:[%s278 + $0x30] sm:$0xff] %vm326, %v1453
      %1466 = vst.msk [vmem:[%s278 + $0x38] sm:$0xff] %vm326, %v1456
      %p1467 = scmp.lt.s32.totalorder %s18, 1
      %s1468 = scalar_select %p1467, %s18, 1
      %s1469 = smul.addr %s1468, 8
      %s1470 = smul.addr %s1469, 8
      %s1471 = scalar_lea.vmem %s7, %s1470
      // Predicated region
      $region49: #{_lambda_.3} parent=47 // pred_check
        %p1472 = pneg %p188
      $region50: #{_lambda_.3} parent=47 // pred_check_branch
        %1474 = sbr.rel (%p1472) target = $region52
      $region51: #{_lambda_.3} parent=47 // pred_region
        _
      $region52: #{_lambda_.3} parent=47 // pred_fallthru
        _
    $region48: #{_lambda_.3} parent=5 // pred_fallthru
      _
    %p1475 = scmp.le.s32.totalorder 2, %s13
    // Predicated region
    $region53: #{_lambda_.3} parent=5 // pred_check
      %p1476 = pneg %p1475
    $region54: #{_lambda_.3} parent=5 // pred_check_branch
      %1478 = sbr.rel (%p1476) target = $region56
    $region55: #{_lambda_.3} parent=5 // pred_region
      %s1479 = ssub.s32 %s13, 2
      // Predicated region
      $region57: #{_lambda_.3} parent=55 // pred_check
        %p1480 = pneg %p194
      $region58: #{_lambda_.3} parent=55 // pred_check_branch
        %1482 = sbr.rel (%p1480) target = $region60
      $region59: #{_lambda_.3} parent=55 // pred_region
        %p1483 = scmp.lt.s32.totalorder %s19, 1
        %s1484 = scalar_select %p1483, %s19, 1
        %s1485 = smul.addr %s1484, 8
        %s1486 = smul.addr %s1485, 8
        %s1487 = scalar_lea.vmem %s7, %s1486
      $region60: #{_lambda_.3} parent=55 // pred_fallthru
        _
    $region56: #{_lambda_.3} parent=5 // pred_fallthru
      _
  $region6: #{_lambda_.3} parent=0 // loop_footer
    %s17 = sadd.s32 1, %s13
  $region7: #{_lambda_.3} parent=0 // loop_footer_branch
    %12 = sbr.rel target = $region3
  $region8: #{_lambda_.3} parent=0 // loop_exit
    _

</llo_original>
